<compile_context>
chip_gen: v6e
topology: v6e:2x2x1
jax: 0.10.0
libtpu: 0.0.40
codegen_flags: <defaults>
</compile_context>

<pallas_src>
import jax
import jax.numpy as jnp
from jax import lax
from jax.experimental import pallas as pl
from jax.experimental.pallas import tpu as pltpu
import numpy as np

H_IN = 271                 # required by the (271, 1) conv kernel in the module
KW1 = 25                   # Conv2d(1, 40, (1, 25))
POOL_W, POOL_S = 51, 5
KT = KW1 + POOL_W - 1      # 75 composed taps
C_HID = 40
EMB = 40

# Tiling budgets chosen to be v7x-safe (64 MiB VMEM/TC); also good on v5e/v6e.
STAGE1_MAX_LANES = 4096    # lane tile over H*P in stage 1 (multiple of 128)
STAGE2_MAX_LANES = 512     # cap on Bt*P so 2x (C*H, Bt*P) bf16 buffers stay < ~24 MiB
DENSE_LANES = 128          # minimum lanes/step required to justify splitting the grid


# --------------------------------------------------------------------------------------
# Stage 1: fused Conv2d(1,C,(1,25)) + AvgPool2d((1,51),(1,5)) + BatchNorm(folded) + ELU
# One bf16 MXU matmul per (batch, lane-tile) grid step: (C,75) @ (75, LT).
# --------------------------------------------------------------------------------------
def _conv_pool_elu_kernel(patches_ref, wc_ref, b1_ref, o_ref):
    a = jnp.dot(wc_ref[...], patches_ref[0],
                preferred_element_type=jnp.float32)          # (C, LT) on the MXU
    a = a + b1_ref[...]                                      # folded conv1 bias + BN1
    # ELU, overflow-safe form (no inf produced in the untaken branch).
    a = jnp.where(a > 0, a, jnp.exp(jnp.minimum(a, 0.0)) - 1.0)
    o_ref[0] = a.astype(o_ref.dtype)                         # lane-dense bf16 store


# --------------------------------------------------------------------------------------
# Stage 2: Conv2d(C,C,(271,1)) + BatchNorm(folded) + ELU + Dropout(eval=id)
#          + Conv2d(C,emb,(1,1)) projection.  Pure MXU matmuls + elementwise.
# --------------------------------------------------------------------------------------
def _head_kernel(a2_ref, w2_ref, b2_ref, w3_ref, b3_ref, o_ref):
    z = jnp.dot(w2_ref[...], a2_ref[0],
                preferred_element_type=jnp.float32)          # (C, Bt*P)
    z = z + b2_ref[...]                                      # folded conv2 bias + BN2
    z = jnp.where(z > 0, z, jnp.exp(jnp.minimum(z, 0.0)) - 1.0)   # ELU
    # Dropout(0.5): identity at inference.
    # TODO(synk): training-mode dropout RNG masking not implemented.
    out = jnp.dot(w3_ref[...], z.astype(w3_ref.dtype),
                  preferred_element_type=jnp.float32) + b3_ref[...]   # (emb, Bt*P)
    o_ref[0] = out.astype(o_ref.dtype)


def _pick_batch_tile(B, P, max_lanes=STAGE2_MAX_LANES, dense_lanes=DENSE_LANES):
    """Lane-density-driven batch tile for stage 2.

    Only split the batch into multiple grid steps when every step still gets a
    lane-dense (>= 128 lanes) block (worth it for v7x's 2 TCs); otherwise one fat
    step carrying all B*P lanes beats many lane-starved steps (v5e/v6e single TC,
    tiny batches).  Bt*P is capped so the double-buffered activation block fits the
    v7x 64 MiB/TC VMEM budget.
    """
    divs = [d for d in range(1, B + 1) if B % d == 0]
    fit = [d for d in divs if d * P <= max_lanes] or [1]
    dense_multi = [d for d in fit if d * P >= dense_lanes and B // d >= 2]
    if dense_multi:
        return max(dense_multi)    # few (>=2), fat, lane-dense steps
    return max(fit)                # one fat step


def patch_embedding_forward(x, params, emb=EMB, matmul_dtype=jnp.bfloat16):
    """x: (B, 1, 271, W) fp32 (NCHW).  Returns (B, P, emb) f32."""
    B, Cin, H, W = x.shape
    assert Cin == 1 and H == H_IN, (Cin, H)
    C = C_HID
    P = (W - KW1 + 1 - POOL_W) // POOL_S + 1     # pooled width
    assert P >= 1, "input width too small for Conv(1,25) + AvgPool(1,51)"
    eps = 1e-5
    f32 = jnp.float32

    # ---------------- parameter folding (free algebra, done once in the wrapper) -------
    s1 = params['g1'] / jnp.sqrt(params['rv1'] + eps)
    t1 = params['beta1'] - params['rm1'] * s1
    s2 = params['g2'] / jnp.sqrt(params['rv2'] + eps)
    t2 = params['beta2'] - params['rm2'] * s2

    # Compose conv1 (25 taps) with the 1/51 avg-pool box -> 75-tap, stride-5 kernel.
    w1k = params['w1'][:, 0, 0, :].astype(f32)                        # (C, 25)
    k_idx = np.arange(KW1)[:, None]
    t_idx = np.arange(KT)[None, :]
    band = (((t_idx - k_idx) >= 0) &
            ((t_idx - k_idx) < POOL_W)).astype(np.float32) / POOL_W   # (25, 75) static
    wc = w1k @ jnp.asarray(band)                                      # (C, 75)
    wc_f = (s1[:, None] * wc).astype(matmul_dtype)                    # BN1 scale folded
    bias1 = (s1 * params['b1'] + t1).reshape(C, 1).astype(f32)

    w2_f = (s2[:, None] *
            params['w2'][:, :, :, 0].reshape(C, C * H)).astype(matmul_dtype)
    bias2 = (s2 * params['b2'] + t2).reshape(C, 1).astype(f32)
    w3_f = params['w3'][:, :, 0, 0].astype(matmul_dtype)              # (emb, C)
    bias3 = params['b3'].reshape(emb, 1).astype(f32)

    # ------------- im2col for the composed stride-5 conv (static slices, bf16) ---------
    # patches[b, t, h*P + p] = x[b, 0, h, 5*p + t]; built from 75 static strided slices
    # of the bf16-cast input (no XLA gather, half the plumbing bytes of f32).
    x2 = x[:, 0, :, :].astype(matmul_dtype)                           # (B, H, W) bf16
    span = POOL_S * (P - 1) + 1
    cols = [x2[:, :, t:t + span:POOL_S] for t in range(KT)]           # 75 x (B, H, P)
    patches = jnp.stack(cols, axis=1).reshape(B, KT, H * P)           # (B, 75, H*P)

    # ------------- stage 1: conv1 + avgpool + BN1 + ELU ---------------------------------
    HP = H * P
    LT = HP if HP <= STAGE1_MAX_LANES else STAGE1_MAX_LANES           # lane tile
    n_l = -(-HP // LT)

    ce1 = pl.CostEstimate(
        flops=2 * B * C * KT * HP,
        transcendentals=B * C * HP,
        bytes_accessed=B * KT * HP * 2 + C * KT * 2 + C * 4 + B * C * HP * 2)

    a = pl.pallas_call(
        _conv_pool_elu_kernel,
        out_shape=jax.ShapeDtypeStruct((B, C, HP), matmul_dtype),
        grid=(B, n_l),
        in_specs=[
            pl.BlockSpec((1, KT, LT), lambda b, l: (b, 0, l)),        # im2col patches
            pl.BlockSpec((C, KT), lambda b, l: (0, 0)),               # composed weights
            pl.BlockSpec((C, 1), lambda b, l: (0, 0)),                # folded bias/shift
        ],
        out_specs=pl.BlockSpec((1, C, LT), lambda b, l: (b, 0, l)),
        compiler_params=pltpu.CompilerParams(
            dimension_semantics=("parallel", "parallel"),
            vmem_limit_bytes=32 * 1024 * 1024),
        cost_estimate=ce1,
    )(patches, wc_f, bias1)

    # Regroup (B, C, H*P) -> (G, C*H, Bt*P): row-major reshapes are free; the transpose
    # is a single cheap XLA copy (no-op when Bt == 1).
    Bt = _pick_batch_tile(B, P)
    G = B // Bt
    a2 = a.reshape(G, Bt, C * H, P)
    a2 = jnp.transpose(a2, (0, 2, 1, 3)).reshape(G, C * H, Bt * P)

    # ------------- stage 2: conv2(271,1) + BN2 + ELU + 1x1 projection -------------------
    ce2 = pl.CostEstimate(
        flops=2 * B * P * (C * C * H + emb * C),
        transcendentals=B * P * C,
        bytes_accessed=(B * C * H * P * 2 + C * C * H * 2 + C * 4
                        + emb * C * 2 + emb * 4 + B * emb * P * 4))

    out_ep = pl.pallas_call(
        _head_kernel,
        out_shape=jax.ShapeDtypeStruct((G, emb, Bt * P), f32),
        grid=(G,),
        in_specs=[
            pl.BlockSpec((1, C * H, Bt * P), lambda g: (g, 0, 0)),    # activations
            pl.BlockSpec((C, C * H), lambda g: (0, 0)),               # conv2 wt (folded)
            pl.BlockSpec((C, 1), lambda g: (0, 0)),                   # folded bias2
            pl.BlockSpec((emb, C), lambda g: (0, 0)),                 # 1x1 projection wt
            pl.BlockSpec((emb, 1), lambda g: (0, 0)),                 # projection bias
        ],
        out_specs=pl.BlockSpec((1, emb, Bt * P), lambda g: (g, 0, 0)),
        compiler_params=pltpu.CompilerParams(
            dimension_semantics=("parallel",),
            vmem_limit_bytes=40 * 1024 * 1024),                       # < v7x 64 MiB/TC
        cost_estimate=ce2,
    )(a2, w2_f, bias2, w3_f, bias3)

    # Rearrange('b e (h) (w) -> b (h w) e') with h == 1
    out = out_ep.reshape(G, emb, Bt, P)
    out = jnp.transpose(out, (0, 2, 3, 1)).reshape(B, P, emb)
    return out


def init_params(key, emb=EMB, C=C_HID, H=H_IN, kw=KW1):
    ks = jax.random.split(key, 14)
    f32 = jnp.float32
    return {
        'w1': 0.10 * jax.random.normal(ks[0], (C, 1, 1, kw), f32),
        'b1': 0.05 * jax.random.normal(ks[1], (C,), f32),
        'g1': 1.0 + 0.1 * jax.random.normal(ks[2], (C,), f32),
        'beta1': 0.1 * jax.random.normal(ks[3], (C,), f32),
        'rm1': 0.1 * jax.random.normal(ks[4], (C,), f32),
        'rv1': 1.0 + 0.2 * jax.random.uniform(ks[5], (C,), f32),
        'w2': 0.02 * jax.random.normal(ks[6], (C, C, H, 1), f32),
        'b2': 0.05 * jax.random.normal(ks[7], (C,), f32),
        'g2': 1.0 + 0.1 * jax.random.normal(ks[8], (C,), f32),
        'beta2': 0.1 * jax.random.normal(ks[9], (C,), f32),
        'rm2': 0.1 * jax.random.normal(ks[10], (C,), f32),
        'rv2': 1.0 + 0.2 * jax.random.uniform(ks[11], (C,), f32),
        'w3': 0.10 * jax.random.normal(ks[12], (emb, C, 1, 1), f32),
        'b3': 0.05 * jax.random.normal(ks[13], (emb,), f32),
    }


def reference_forward(x, params):
    """Pure-JAX (XLA) reference mirroring the PyTorch module in eval mode."""
    eps = 1e-5
    dn = ('NCHW', 'OIHW', 'NCHW')
    hi = lax.Precision.HIGHEST
    y = lax.conv_general_dilated(x, params['w1'], (1, 1), 'VALID',
                                 dimension_numbers=dn, precision=hi)
    y = y + params['b1'][None, :, None, None]
    y = lax.reduce_window(y, 0.0, lax.add, (1, 1, 1, POOL_W),
                          (1, 1, 1, POOL_S), 'VALID') / float(POOL_W)
    s1 = params['g1'] / jnp.sqrt(params['rv1'] + eps)
    t1 = params['beta1'] - params['rm1'] * s1
    y = y * s1[None, :, None, None] + t1[None, :, None, None]
    y = jnp.where(y > 0, y, jnp.exp(y) - 1.0)
    z = lax.conv_general_dilated(y, params['w2'], (1, 1), 'VALID',
                                 dimension_numbers=dn, precision=hi)
    z = z + params['b2'][None, :, None, None]
    s2 = params['g2'] / jnp.sqrt(params['rv2'] + eps)
    t2 = params['beta2'] - params['rm2'] * s2
    z = z * s2[None, :, None, None] + t2[None, :, None, None]
    z = jnp.where(z > 0, z, jnp.exp(z) - 1.0)
    o = lax.conv_general_dilated(z, params['w3'], (1, 1), 'VALID',
                                 dimension_numbers=dn, precision=hi)
    o = o + params['b3'][None, :, None, None]          # (B, E, 1, P)
    return jnp.transpose(o[:, :, 0, :], (0, 2, 1))     # (B, P, E)


if __name__ == "__main__":
    key = jax.random.PRNGKey(0)
    kx, kp = jax.random.split(key)
    B, W = 2, 100                                        # H is fixed at 271 by the module
    x = jax.random.normal(kx, (B, 1, H_IN, W), jnp.float32)
    params = init_params(kp)

    out = jax.block_until_ready(patch_embedding_forward(x, params))
    ref = jax.block_until_ready(reference_forward(x, params))

    P = ((W - KW1 + 1) - POOL_W) // POOL_S + 1
    assert out.shape == (B, P, EMB), out.shape
    # bf16 operands (f32 accumulation) in the stage-1 conv and the K=10840 conv2/conv3
    # contractions -> 3e-2 tolerance against the f32 HIGHEST-precision reference.
    np.testing.assert_allclose(np.asarray(out), np.asarray(ref), rtol=3e-2, atol=3e-2)
    print("KERNEL_OK")
</pallas_src>

<mosaic_0001>
module attributes {stable_mosaic.version = 11 : i64} {
  func.func @_conv_pool_elu_kernel(%arg0: i32, %arg1: i32, %arg2: memref<1x75x1626xbf16, #tpu.memory_space<vmem>>, %arg3: memref<40x75xbf16, #tpu.memory_space<vmem>>, %arg4: memref<40x1xf32, #tpu.memory_space<vmem>>, %arg5: memref<1x40x1626xbf16, #tpu.memory_space<vmem>>) attributes {dimension_semantics = [#tpu.dimension_semantics<parallel>, #tpu.dimension_semantics<parallel>], iteration_bounds = array<i64: 2, 1>, scalar_prefetch = 0 : i64, scratch_operands = 0 : i64, tpu.core_type = #tpu.core_type<tc>, window_params = [{transform_indices = @transform_0, window_bounds = array<i64: 1, 75, 1626>}, {pipeline_mode = #tpu.pipeline_mode<synchronous>, transform_indices = @transform_1, window_bounds = array<i64: 40, 75>}, {pipeline_mode = #tpu.pipeline_mode<synchronous>, transform_indices = @transform_2, window_bounds = array<i64: 40, 1>}, {transform_indices = @transform_3, window_bounds = array<i64: 1, 40, 1626>}]} {
    %c0 = arith.constant 0 : index
    %c0_0 = arith.constant 0 : index
    %0 = vector.load %arg3[%c0, %c0_0] : memref<40x75xbf16, #tpu.memory_space<vmem>>, vector<40x75xbf16>
    %c0_1 = arith.constant 0 : index
    %c0_2 = arith.constant 0 : index
    %c0_3 = arith.constant 0 : index
    %1 = vector.load %arg2[%c0_1, %c0_2, %c0_3] : memref<1x75x1626xbf16, #tpu.memory_space<vmem>>, vector<1x75x1626xbf16>
    %2 = vector.shape_cast %1 : vector<1x75x1626xbf16> to vector<75x1626xbf16>
    %cst = arith.constant dense<0.000000e+00> : vector<40x1626xf32>
    %3 = tpu.matmul %0, %2, %cst {dimension_numbers = #tpu.dot_dimension_numbers<[1], [0], [0], [1], [0, 0, 1, 1], [], []>} : vector<40x75xbf16>, vector<75x1626xbf16>, vector<40x1626xf32> -> vector<40x1626xf32>
    %c0_4 = arith.constant 0 : index
    %c0_5 = arith.constant 0 : index
    %4 = vector.load %arg4[%c0_4, %c0_5] : memref<40x1xf32, #tpu.memory_space<vmem>>, vector<40x1xf32>
    %5 = vector.broadcast %4 : vector<40x1xf32> to vector<40x1626xf32>
    %6 = arith.addf %3, %5 : vector<40x1626xf32>
    %cst_6 = arith.constant 0.000000e+00 : f32
    %7 = vector.broadcast %cst_6 : f32 to vector<40x1626xf32>
    %8 = arith.cmpf ogt, %6, %7 : vector<40x1626xf32>
    %cst_7 = arith.constant 0.000000e+00 : f32
    %9 = vector.broadcast %cst_7 : f32 to vector<40x1626xf32>
    %10 = arith.minimumf %6, %9 : vector<40x1626xf32>
    %11 = math.exp %10 : vector<40x1626xf32>
    %cst_8 = arith.constant 1.000000e+00 : f32
    %12 = vector.broadcast %cst_8 : f32 to vector<40x1626xf32>
    %13 = arith.subf %11, %12 : vector<40x1626xf32>
    %14 = arith.select %8, %6, %13 : vector<40x1626xi1>, vector<40x1626xf32>
    %15 = arith.truncf %14 : vector<40x1626xf32> to vector<40x1626xbf16>
    %c0_9 = arith.constant 0 : index
    %c0_10 = arith.constant 0 : index
    %c0_11 = arith.constant 0 : index
    %16 = vector.load %arg5[%c0_9, %c0_10, %c0_11] : memref<1x40x1626xbf16, #tpu.memory_space<vmem>>, vector<1x40x1626xbf16>
    %17 = vector.shape_cast %16 : vector<1x40x1626xbf16> to vector<40x1626xbf16>
    %18 = vector.shape_cast %15 : vector<40x1626xbf16> to vector<1x40x1626xbf16>
    tpu.vector_store %arg5[%c0_9, %c0_10, %c0_11], %18 {strides = array<i32>} : memref<1x40x1626xbf16, #tpu.memory_space<vmem>>, vector<1x40x1626xbf16>,
    return
  }
  func.func @transform_0(%arg0: i32, %arg1: i32) -> (i32, i32, i32) {
    %c0_i32 = arith.constant 0 : i32
    %c0_i32_0 = arith.constant 0 : i32
    return %arg0, %c0_i32, %arg1 : i32, i32, i32
  }
  func.func @transform_1(%arg0: i32, %arg1: i32) -> (i32, i32) {
    %c0_i32 = arith.constant 0 : i32
    %c0_i32_0 = arith.constant 0 : i32
    %c0_i32_1 = arith.constant 0 : i32
    return %c0_i32, %c0_i32_0 : i32, i32
  }
  func.func @transform_2(%arg0: i32, %arg1: i32) -> (i32, i32) {
    %c0_i32 = arith.constant 0 : i32
    %c0_i32_0 = arith.constant 0 : i32
    %c0_i32_1 = arith.constant 0 : i32
    return %c0_i32, %c0_i32_0 : i32, i32
  }
  func.func @transform_3(%arg0: i32, %arg1: i32) -> (i32, i32, i32) {
    %c0_i32 = arith.constant 0 : i32
    %c0_i32_0 = arith.constant 0 : i32
    return %arg0, %c0_i32, %arg1 : i32, i32, i32
  }
}

</mosaic_0001>

<llo_original>
// kernel: tpu_custom_call.1
$region0: #{tpu_custom_call.1}
  #allocation0 [shape = 'u32[]', space=smem, size = 0x4, offset = 0x4, fixed_abs, tag = 'smem constant byte address 0x4 - core index']
  #allocation1 [shape = 'u32[144,128]{1,0:T(1,128)}', space=vmem, size = 0x12000, scoped, tag = 'internal scratch']
  %s0 = inlined_call_operand.vmem [shape: bf16[2,75,1626], index: 0, kind: input, shape index: {}]
  %s1 = inlined_call_operand.vmem [shape: bf16[40,75], index: 1, kind: input, shape index: {}]
  %s2 = inlined_call_operand.vmem [shape: f32[40,1], index: 2, kind: input, shape index: {}]
  %s3 = inlined_call_operand.hbm [shape: bf16[2,40,1626], index: 3, kind: output, shape index: {}]
  %s4 = sld [smem:[#allocation0]]
  $region45: #{tpu_custom_call.1} parent=0
    _
  %s6 = ssub.s32 1, %s4
  %s7 = scalar_select 0, %s6, %s4
  $region1: #{tpu_custom_call.1} parent=0
    #allocation2 [shape = 'u8[266240]{0}', space=vmem, size = 0x41000, scoped, tag = 'output window, operand 0']
    #allocation3 [shape = 's32[2]{0}', space=sflag, size = 0x8, scoped, tag = 'scoped memory for tpu_custom_call.1']
    %8 = vsyncpa [#allocation3], 0
    %s9 = scalar_lea.sflag [#allocation3], 1
    %10 = vsyncpa %s9, 0
    loop: start=0, step=1, limit=4
    $region2: #{tpu_custom_call.1} parent=1 // loop_pre_header
      _
    $region3: #{tpu_custom_call.1} parent=1 // loop_header
      %s12 = sphi 0, %s16
      %p13 = scmp.ge.s32.totalorder %s12, 4
      %s19 = sphi 0, %s31
      %s20 = sphi 0, %s27
      %s21 = sphi 0, %s19
      %s22 = sphi 0, %s20
      %s23 = sphi 0, %s21
      %s24 = sphi 0, %s22
      %s36 = sphi 0, %s38
      %s39 = sphi 0, %s36
      %s40 = sphi 0, %s39
      %s56 = sphi 0, %s40
      %s60 = sphi 0, %s60
      %s62 = sphi 0, %s60
      %s63 = sphi 0, %s62
      %s77 = sphi 0, %s63
      %s81 = sphi 0, %s81
      %s83 = sphi 0, %s81
      %s84 = sphi 0, %s83
      %s98 = sphi 0, %s84
      %s106 = sphi 0, %s108
      %s109 = sphi 0, %s106
      %s110 = sphi 0, %s109
      %s126 = sphi 0, %s110
    $region4: #{tpu_custom_call.1} parent=1 // loop_header_branch
      %15 = sbr.rel (%p13) target = $region8
    $region5: #{tpu_custom_call.1} parent=1 // loop_body
      %s17 = ssub.s32 %s12, 1
      %s18 = ssub.s32 %s12, 2
      %s25 = sadd.s32 1, %s20
      %p26 = scmp.ge.s32.totalorder %s25, 1
      %s27 = scalar_select %p26, 0, %s25
      %s28 = sadd.s32 1, %s19
      %s29 = scalar_select %p26, %s28, %s19
      %p30 = scmp.ge.s32.totalorder %s29, 2
      %s31 = scalar_select %p30, 0, %s29
      %s32 = ssub.s32 %s19, %s31
      %s33 = ssub.s32 %s20, %s27
      %s34 = sor.u32 %s32, %s33
      %p35 = scmp.eq.s32.totalorder %s34, 0
      %s37 = sadd.s32 %s36, 1
      %s38 = scalar_select %p35, %s36, %s37
      %p41 = pneg %p35
      %p42 = scmp.eq.s32.totalorder %s12, 1
      %p43 = por %p41, %p42
      %p44 = scmp.ne.s32.totalorder %s36, %s39
      %p45 = scmp.eq.s32.totalorder %s12, 0
      %p46 = por %p44, %p45
      %p47 = scmp.ne.s32.totalorder %s36, %s39
      %p48 = scmp.eq.s32.totalorder %s17, 1
      %p49 = por %p47, %p48
      %p50 = scmp.ne.s32.totalorder %s39, %s40
      %p51 = scmp.eq.s32.totalorder %s17, 0
      %p52 = por %p50, %p51
      %p53 = scmp.ne.s32.totalorder %s39, %s40
      %p54 = scmp.eq.s32.totalorder %s18, 1
      %p55 = por %p53, %p54
      %p57 = scmp.ne.s32.totalorder %s40, %s56
      %p58 = scmp.eq.s32.totalorder %s18, 0
      %p59 = por %p57, %p58
      %s61 = sadd.s32 %s60, 1
      %p64 = scmp.eq.s32.totalorder %s12, 1
      %p65 = scmp.ne.s32.totalorder %s60, %s62
      %p66 = scmp.eq.s32.totalorder %s12, 0
      %p67 = por %p65, %p66
      %p68 = scmp.ne.s32.totalorder %s60, %s62
      %p69 = scmp.eq.s32.totalorder %s17, 1
      %p70 = por %p68, %p69
      %p71 = scmp.ne.s32.totalorder %s62, %s63
      %p72 = scmp.eq.s32.totalorder %s17, 0
      %p73 = por %p71, %p72
      %p74 = scmp.ne.s32.totalorder %s62, %s63
      %p75 = scmp.eq.s32.totalorder %s18, 1
      %p76 = por %p74, %p75
      %p78 = scmp.ne.s32.totalorder %s63, %s77
      %p79 = scmp.eq.s32.totalorder %s18, 0
      %p80 = por %p78, %p79
      %s82 = sadd.s32 %s81, 1
      %p85 = scmp.eq.s32.totalorder %s12, 1
      %p86 = scmp.ne.s32.totalorder %s81, %s83
      %p87 = scmp.eq.s32.totalorder %s12, 0
      %p88 = por %p86, %p87
      %p89 = scmp.ne.s32.totalorder %s81, %s83
      %p90 = scmp.eq.s32.totalorder %s17, 1
      %p91 = por %p89, %p90
      %p92 = scmp.ne.s32.totalorder %s83, %s84
      %p93 = scmp.eq.s32.totalorder %s17, 0
      %p94 = por %p92, %p93
      %p95 = scmp.ne.s32.totalorder %s83, %s84
      %p96 = scmp.eq.s32.totalorder %s18, 1
      %p97 = por %p95, %p96
      %p99 = scmp.ne.s32.totalorder %s84, %s98
      %p100 = scmp.eq.s32.totalorder %s18, 0
      %p101 = por %p99, %p100
      %s102 = ssub.s32 %s19, %s31
      %s103 = ssub.s32 %s20, %s27
      %s104 = sor.u32 %s102, %s103
      %p105 = scmp.eq.s32.totalorder %s104, 0
      %s107 = sadd.s32 %s106, 1
      %s108 = scalar_select %p105, %s106, %s107
      %p111 = pneg %p105
      %p112 = scmp.eq.s32.totalorder %s12, 1
      %p113 = por %p111, %p112
      %p114 = scmp.ne.s32.totalorder %s106, %s109
      %p115 = scmp.eq.s32.totalorder %s12, 0
      %p116 = por %p114, %p115
      %p117 = scmp.ne.s32.totalorder %s106, %s109
      %p118 = scmp.eq.s32.totalorder %s17, 1
      %p119 = por %p117, %p118
      %p120 = scmp.ne.s32.totalorder %s109, %s110
      %p121 = scmp.eq.s32.totalorder %s17, 0
      %p122 = por %p120, %p121
      %p123 = scmp.ne.s32.totalorder %s109, %s110
      %p124 = scmp.eq.s32.totalorder %s18, 1
      %p125 = por %p123, %p124
      %p127 = scmp.ne.s32.totalorder %s110, %s126
      %p128 = scmp.eq.s32.totalorder %s18, 0
      %p129 = por %p127, %p128
      %p130 = scmp.le.s32.totalorder 1, %s12
      %p131 = scmp.lt.s32.totalorder %s12, 3
      %p132 = pnand %p130, %p131
      %p133 = pneg %p132
      // Predicated region
      $region9: #{tpu_custom_call.1} parent=5 // pred_check
        _
      $region10: #{tpu_custom_call.1} parent=5 // pred_check_branch
        %135 = sbr.rel (%p132) target = $region12
      $region11: #{tpu_custom_call.1} parent=5 // pred_region
        %s136 = ssub.s32 %s12, 1
        // Predicated region
        $region13: #{tpu_custom_call.1} parent=11 // pred_check
          %p137 = pneg %p73
        $region14: #{tpu_custom_call.1} parent=11 // pred_check_branch
          %139 = sbr.rel (%p137) target = $region16
        $region15: #{tpu_custom_call.1} parent=11 // pred_region
          _
        $region16: #{tpu_custom_call.1} parent=11 // pred_fallthru
          _
        // Predicated region
        $region17: #{tpu_custom_call.1} parent=11 // pred_check
          %p140 = pneg %p94
        $region18: #{tpu_custom_call.1} parent=11 // pred_check_branch
          %142 = sbr.rel (%p140) target = $region20
        $region19: #{tpu_custom_call.1} parent=11 // pred_region
          _
        $region20: #{tpu_custom_call.1} parent=11 // pred_fallthru
          _
      $region12: #{tpu_custom_call.1} parent=5 // pred_fallthru
        _
      %p143 = scmp.lt.s32.totalorder %s12, 2
      // Predicated region
      $region21: #{tpu_custom_call.1} parent=5 // pred_check
        %p144 = pneg %p143
      $region22: #{tpu_custom_call.1} parent=5 // pred_check_branch
        %146 = sbr.rel (%p144) target = $region24
      $region23: #{tpu_custom_call.1} parent=5 // pred_region
        // Predicated region
        $region25: #{tpu_custom_call.1} parent=23 // pred_check
          %p147 = pneg %p46
        $region26: #{tpu_custom_call.1} parent=23 // pred_check_branch
          %149 = sbr.rel (%p147) target = $region28
        $region27: #{tpu_custom_call.1} parent=23 // pred_region
          %s150 = smul.u32 13, %s20
          %p151 = scmp.lt.s32.totalorder %s19, 1
          %s152 = scalar_select %p151, %s19, 1
          %p153 = scmp.lt.s32.totalorder %s150, 12
          %s154 = scalar_select %p153, %s150, 12
          %s155 = smul.addr %s152, 130
          %s156 = sadd.s32 %s154, %s155
          %s157 = smul.addr %s156, 4
          %s158 = scalar_lea.vmem %s0, %s157
          %s159 = smul.u32 13, %s20
        $region28: #{tpu_custom_call.1} parent=23 // pred_fallthru
          _
      $region24: #{tpu_custom_call.1} parent=5 // pred_fallthru
        _
      %p160 = scmp.le.s32.totalorder 1, %s12
      %p161 = scmp.lt.s32.totalorder %s12, 3
      %p162 = pnand %p160, %p161
      %p163 = pneg %p162
      // Predicated region
      $region29: #{tpu_custom_call.1} parent=5 // pred_check
        _
      $region30: #{tpu_custom_call.1} parent=5 // pred_check_branch
        %165 = sbr.rel (%p162) target = $region32
      $region31: #{tpu_custom_call.1} parent=5 // pred_region
        %s166 = ssub.s32 %s12, 1
        %s167 = smul.u32 13, %s22
        %p168 = scmp.lt.s32.totalorder %s21, 1
        %s169 = scalar_select %p168, %s21, 1
        %p170 = scmp.lt.s32.totalorder %s167, 12
        %s171 = scalar_select %p170, %s167, 12
        %s172 = smul.addr %s169, 130
        %s173 = sadd.s32 %s171, %s172
        %s174 = smul.addr %s173, 4
        %s175 = scalar_lea.vmem %s0, %s174
        %p176 = pneg %p52
        %p177 = pneg %p49
        %p178 = pneg %p73
        %p179 = pneg %p70
        %p180 = pneg %p94
        %p181 = pneg %p91
        %p182 = pneg %p122
        %p183 = pneg %p119
        %s184 = sand.u32 %s109, 1
        %s185 = scalar_lea.sflag [#allocation3], %s184
        %s186 = sand.u32 %s109, 1
        %s187 = smul.addr %s186, 260
        %s188 = scalar_lea.vmem [#allocation2], %s187
        %s189 = smul.u32 13, %s22
        %p190 = scmp.lt.s32.totalorder %s21, 1
        %s191 = scalar_select %p190, %s21, 1
        %p192 = scmp.lt.s32.totalorder %s189, 12
        %s193 = scalar_select %p192, %s189, 12
        %s194 = smul.addr %s191, 130
        %s195 = sadd.s32 %s193, %s194
        %s196 = smul.addr %s195, 4
        %s197 = scalar_lea.vmem %s0, %s196
        %s198 = smul.u32 13, %s22
        %s199 = smul.u32 13, %s22
        %v201 = vld [vmem:[%s1] sm:$0xf]
        %v202 = vld [vmem:[%s1 + $0x4] sm:$0xf]
        %v203 = vld [vmem:[%s1 + $0x8] sm:$0xf]
        %v204 = vld [vmem:[%s1 + $0xc] sm:$0xf]
        %v205 = vld [vmem:[%s1 + $0x10] sm:$0xf]
        %v206 = vld [vmem:[%s197] sm:$0xff]
        %v207 = vld [vmem:[%s197 + $0x8] sm:$0xff]
        %v208 = vld [vmem:[%s197 + $0x10] sm:$0xff]
        %v209 = vld [vmem:[%s197 + $0x18] sm:$0xff]
        %v210 = vld [vmem:[%s197 + $0x20] sm:$0xff]
        %v211 = vld [vmem:[%s197 + $0x28] sm:$0xff]
        %v212 = vld [vmem:[%s197 + $0x30] sm:$0xf]
        %v213 = vld [vmem:[%s197 + $0x34] sm:$0xff]
        %v214 = vld [vmem:[%s197 + $0x3c] sm:$0xff]
        %v215 = vld [vmem:[%s197 + $0x44] sm:$0xff]
        %v216 = vld [vmem:[%s197 + $0x4c] sm:$0xff]
        %v217 = vld [vmem:[%s197 + $0x54] sm:$0xff]
        %v218 = vld [vmem:[%s197 + $0x5c] sm:$0xff]
        %v219 = vld [vmem:[%s197 + $0x64] sm:$0xf]
        %v220 = vld [vmem:[%s197 + $0x68] sm:$0xff]
        %v221 = vld [vmem:[%s197 + $0x70] sm:$0xff]
        %v222 = vld [vmem:[%s197 + $0x78] sm:$0xff]
        %v223 = vld [vmem:[%s197 + $0x80] sm:$0xff]
        %v224 = vld [vmem:[%s197 + $0x88] sm:$0xff]
        %v225 = vld [vmem:[%s197 + $0x90] sm:$0xff]
        %v226 = vld [vmem:[%s197 + $0x98] sm:$0xf]
        %v227 = vld [vmem:[%s197 + $0x9c] sm:$0xff]
        %v228 = vld [vmem:[%s197 + $0xa4] sm:$0xff]
        %v229 = vld [vmem:[%s197 + $0xac] sm:$0xff]
        %v230 = vld [vmem:[%s197 + $0xb4] sm:$0xff]
        %v231 = vld [vmem:[%s197 + $0xbc] sm:$0xff]
        %v232 = vld [vmem:[%s197 + $0xc4] sm:$0xff]
        %v233 = vld [vmem:[%s197 + $0xcc] sm:$0xf]
        %v234 = vld [vmem:[%s197 + $0xd0] sm:$0xff]
        %v235 = vld [vmem:[%s197 + $0xd8] sm:$0xff]
        %v236 = vld [vmem:[%s197 + $0xe0] sm:$0xff]
        %v237 = vld [vmem:[%s197 + $0xe8] sm:$0xff]
        %v238 = vld [vmem:[%s197 + $0xf0] sm:$0xff]
        %v239 = vld [vmem:[%s197 + $0xf8] sm:$0xff]
        %v240 = vld [vmem:[%s197 + $0x100] sm:$0xf]
        %v241 = vld [vmem:[%s197 + $0x104] sm:$0xff]
        %v242 = vld [vmem:[%s197 + $0x10c] sm:$0xff]
        %v243 = vld [vmem:[%s197 + $0x114] sm:$0xff]
        %v244 = vld [vmem:[%s197 + $0x11c] sm:$0xff]
        %v245 = vld [vmem:[%s197 + $0x124] sm:$0xff]
        %v246 = vld [vmem:[%s197 + $0x12c] sm:$0xff]
        %v247 = vld [vmem:[%s197 + $0x134] sm:$0xf]
        %v248 = vld [vmem:[%s197 + $0x138] sm:$0xff]
        %v249 = vld [vmem:[%s197 + $0x140] sm:$0xff]
        %v250 = vld [vmem:[%s197 + $0x148] sm:$0xff]
        %v251 = vld [vmem:[%s197 + $0x150] sm:$0xff]
        %v252 = vld [vmem:[%s197 + $0x158] sm:$0xff]
        %v253 = vld [vmem:[%s197 + $0x160] sm:$0xff]
        %v254 = vld [vmem:[%s197 + $0x168] sm:$0xf]
        %v255 = vld [vmem:[%s197 + $0x16c] sm:$0xff]
        %v256 = vld [vmem:[%s197 + $0x174] sm:$0xff]
        %v257 = vld [vmem:[%s197 + $0x17c] sm:$0xff]
        %v258 = vld [vmem:[%s197 + $0x184] sm:$0xff]
        %v259 = vld [vmem:[%s197 + $0x18c] sm:$0xff]
        %v260 = vld [vmem:[%s197 + $0x194] sm:$0xff]
        %v261 = vld [vmem:[%s197 + $0x19c] sm:$0xf]
        %v262 = vld [vmem:[%s197 + $0x1a0] sm:$0xff]
        %v263 = vld [vmem:[%s197 + $0x1a8] sm:$0xff]
        %v264 = vld [vmem:[%s197 + $0x1b0] sm:$0xff]
        %v265 = vld [vmem:[%s197 + $0x1b8] sm:$0xff]
        %v266 = vld [vmem:[%s197 + $0x1c0] sm:$0xff]
        %v267 = vld [vmem:[%s197 + $0x1c8] sm:$0xff]
        %v268 = vld [vmem:[%s197 + $0x1d0] sm:$0xf]
        %v269 = vld [vmem:[%s197 + $0x1d4] sm:$0x33]
        %v270 = vld [vmem:[%s197 + $0x1dc] sm:$0x33]
        %v271 = vld [vmem:[%s197 + $0x1e4] sm:$0x33]
        %v272 = vld [vmem:[%s197 + $0x1ec] sm:$0x33]
        %v273 = vld [vmem:[%s197 + $0x1f4] sm:$0x33]
        %v274 = vld [vmem:[%s197 + $0x1fc] sm:$0x33]
        %v275 = vld [vmem:[%s197 + $0x204] sm:$0x3]
        %v276 = vld [vmem:[%s2] sm:$0xff]
        %v277 = vld [vmem:[%s2 + $0x8] sm:$0xff]
        %v278 = vld [vmem:[%s2 + $0x10] sm:$0xff]
        %v279 = vld [vmem:[%s2 + $0x18] sm:$0xff]
        %v280 = vld [vmem:[%s2 + $0x20] sm:$0xff]
        %282 = vset.pattern.permute.xlu0 0
        %283 = vperm.xlu0 %282, %v276
        %v284 = vpop.permute.xlu0 %283
        %287 = vset.pattern.permute.xlu0 0
        %288 = vperm.xlu0 %287, %v277
        %v289 = vpop.permute.xlu0 %288
        %292 = vset.pattern.permute.xlu0 0
        %293 = vperm.xlu0 %292, %v278
        %v294 = vpop.permute.xlu0 %293
        %297 = vset.pattern.permute.xlu0 0
        %298 = vperm.xlu0 %297, %v279
        %v299 = vpop.permute.xlu0 %298
        %302 = vset.pattern.permute.xlu0 0
        %303 = vperm.xlu0 %302, %v280
        %v304 = vpop.permute.xlu0 %303
        %v311 = vunpack.c.l.b16 %v201
        %v312 = vunpack.c.l.b16 %v202
        %v313 = vunpack.c.l.b16 %v203
        %v314 = vunpack.c.l.b16 %v204
        %v315 = vunpack.c.l.b16 %v205
        %v316 = vpack.c.b16 %v312, %v311
        %v317 = vpack.c.b16 %v314, %v313
        %v318 = vpack.c.b16 %v315, %v315
        %v389 = vunpack.c.l.b16 %v206
        %v390 = vunpack.c.h.b16 %v206
        %v391 = vunpack.c.l.b16 %v207
        %v392 = vunpack.c.h.b16 %v207
        %v393 = vunpack.c.l.b16 %v208
        %v394 = vunpack.c.h.b16 %v208
        %v395 = vunpack.c.l.b16 %v209
        %v396 = vunpack.c.h.b16 %v209
        %v397 = vunpack.c.l.b16 %v210
        %v398 = vunpack.c.h.b16 %v210
        %v399 = vunpack.c.l.b16 %v211
        %v400 = vunpack.c.h.b16 %v211
        %v401 = vunpack.c.l.b16 %v212
        %v402 = vunpack.c.l.b16 %v213
        %v403 = vunpack.c.h.b16 %v213
        %v404 = vunpack.c.l.b16 %v214
        %v405 = vunpack.c.h.b16 %v214
        %v406 = vunpack.c.l.b16 %v215
        %v407 = vunpack.c.h.b16 %v215
        %v408 = vunpack.c.l.b16 %v216
        %v409 = vunpack.c.h.b16 %v216
        %v410 = vunpack.c.l.b16 %v217
        %v411 = vunpack.c.h.b16 %v217
        %v412 = vunpack.c.l.b16 %v218
        %v413 = vunpack.c.h.b16 %v218
        %v414 = vunpack.c.l.b16 %v219
        %v415 = vunpack.c.l.b16 %v220
        %v416 = vunpack.c.h.b16 %v220
        %v417 = vunpack.c.l.b16 %v221
        %v418 = vunpack.c.h.b16 %v221
        %v419 = vunpack.c.l.b16 %v222
        %v420 = vunpack.c.h.b16 %v222
        %v421 = vunpack.c.l.b16 %v223
        %v422 = vunpack.c.h.b16 %v223
        %v423 = vunpack.c.l.b16 %v224
        %v424 = vunpack.c.h.b16 %v224
        %v425 = vunpack.c.l.b16 %v225
        %v426 = vunpack.c.h.b16 %v225
        %v427 = vunpack.c.l.b16 %v226
        %v428 = vunpack.c.l.b16 %v227
        %v429 = vunpack.c.h.b16 %v227
        %v430 = vunpack.c.l.b16 %v228
        %v431 = vunpack.c.h.b16 %v228
        %v432 = vunpack.c.l.b16 %v229
        %v433 = vunpack.c.h.b16 %v229
        %v434 = vunpack.c.l.b16 %v230
        %v435 = vunpack.c.h.b16 %v230
        %v436 = vunpack.c.l.b16 %v231
        %v437 = vunpack.c.h.b16 %v231
        %v438 = vunpack.c.l.b16 %v232
        %v439 = vunpack.c.h.b16 %v232
        %v440 = vunpack.c.l.b16 %v233
        %v441 = vunpack.c.l.b16 %v234
        %v442 = vunpack.c.h.b16 %v234
        %v443 = vunpack.c.l.b16 %v235
        %v444 = vunpack.c.h.b16 %v235
        %v445 = vunpack.c.l.b16 %v236
        %v446 = vunpack.c.h.b16 %v236
        %v447 = vunpack.c.l.b16 %v237
        %v448 = vunpack.c.h.b16 %v237
        %v449 = vunpack.c.l.b16 %v238
        %v450 = vunpack.c.h.b16 %v238
        %v451 = vunpack.c.l.b16 %v239
        %v452 = vunpack.c.h.b16 %v239
        %v453 = vunpack.c.l.b16 %v240
        %v454 = vunpack.c.l.b16 %v241
        %v455 = vunpack.c.h.b16 %v241
        %v456 = vunpack.c.l.b16 %v242
        %v457 = vunpack.c.h.b16 %v242
        %v458 = vunpack.c.l.b16 %v243
        %v459 = vunpack.c.h.b16 %v243
        %v460 = vunpack.c.l.b16 %v244
        %v461 = vunpack.c.h.b16 %v244
        %v462 = vunpack.c.l.b16 %v245
        %v463 = vunpack.c.h.b16 %v245
        %v464 = vunpack.c.l.b16 %v246
        %v465 = vunpack.c.h.b16 %v246
        %v466 = vunpack.c.l.b16 %v247
        %v467 = vunpack.c.l.b16 %v248
        %v468 = vunpack.c.h.b16 %v248
        %v469 = vunpack.c.l.b16 %v249
        %v470 = vunpack.c.h.b16 %v249
        %v471 = vunpack.c.l.b16 %v250
        %v472 = vunpack.c.h.b16 %v250
        %v473 = vunpack.c.l.b16 %v251
        %v474 = vunpack.c.h.b16 %v251
        %v475 = vunpack.c.l.b16 %v252
        %v476 = vunpack.c.h.b16 %v252
        %v477 = vunpack.c.l.b16 %v253
        %v478 = vunpack.c.h.b16 %v253
        %v479 = vunpack.c.l.b16 %v254
        %v480 = vunpack.c.l.b16 %v255
        %v481 = vunpack.c.h.b16 %v255
        %v482 = vunpack.c.l.b16 %v256
        %v483 = vunpack.c.h.b16 %v256
        %v484 = vunpack.c.l.b16 %v257
        %v485 = vunpack.c.h.b16 %v257
        %v486 = vunpack.c.l.b16 %v258
        %v487 = vunpack.c.h.b16 %v258
        %v488 = vunpack.c.l.b16 %v259
        %v489 = vunpack.c.h.b16 %v259
        %v490 = vunpack.c.l.b16 %v260
        %v491 = vunpack.c.h.b16 %v260
        %v492 = vunpack.c.l.b16 %v261
        %v493 = vunpack.c.l.b16 %v262
        %v494 = vunpack.c.h.b16 %v262
        %v495 = vunpack.c.l.b16 %v263
        %v496 = vunpack.c.h.b16 %v263
        %v497 = vunpack.c.l.b16 %v264
        %v498 = vunpack.c.h.b16 %v264
        %v499 = vunpack.c.l.b16 %v265
        %v500 = vunpack.c.h.b16 %v265
        %v501 = vunpack.c.l.b16 %v266
        %v502 = vunpack.c.h.b16 %v266
        %v503 = vunpack.c.l.b16 %v267
        %v504 = vunpack.c.h.b16 %v267
        %v505 = vunpack.c.l.b16 %v268
        %v506 = vunpack.c.l.b16 %v269
        %v507 = vunpack.c.h.b16 %v269
        %v508 = vunpack.c.l.b16 %v270
        %v509 = vunpack.c.h.b16 %v270
        %v510 = vunpack.c.l.b16 %v271
        %v511 = vunpack.c.h.b16 %v271
        %v512 = vunpack.c.l.b16 %v272
        %v513 = vunpack.c.h.b16 %v272
        %v514 = vunpack.c.l.b16 %v273
        %v515 = vunpack.c.h.b16 %v273
        %v516 = vunpack.c.l.b16 %v274
        %v517 = vunpack.c.h.b16 %v274
        %v518 = vunpack.c.l.b16 %v275
        %v519 = vpack.c.b16 %v402, %v389
        %v520 = vpack.c.b16 %v403, %v390
        %v521 = vpack.c.b16 %v404, %v391
        %v522 = vpack.c.b16 %v405, %v392
        %v523 = vpack.c.b16 %v406, %v393
        %v524 = vpack.c.b16 %v407, %v394
        %v525 = vpack.c.b16 %v408, %v395
        %v526 = vpack.c.b16 %v409, %v396
        %v527 = vpack.c.b16 %v410, %v397
        %v528 = vpack.c.b16 %v411, %v398
        %v529 = vpack.c.b16 %v412, %v399
        %v530 = vpack.c.b16 %v413, %v400
        %v531 = vpack.c.b16 %v414, %v401
        %v532 = vpack.c.b16 %v428, %v415
        %v533 = vpack.c.b16 %v429, %v416
        %v534 = vpack.c.b16 %v430, %v417
        %v535 = vpack.c.b16 %v431, %v418
        %v536 = vpack.c.b16 %v432, %v419
        %v537 = vpack.c.b16 %v433, %v420
        %v538 = vpack.c.b16 %v434, %v421
        %v539 = vpack.c.b16 %v435, %v422
        %v540 = vpack.c.b16 %v436, %v423
        %v541 = vpack.c.b16 %v437, %v424
        %v542 = vpack.c.b16 %v438, %v425
        %v543 = vpack.c.b16 %v439, %v426
        %v544 = vpack.c.b16 %v440, %v427
        %v545 = vpack.c.b16 %v454, %v441
        %v546 = vpack.c.b16 %v455, %v442
        %v547 = vpack.c.b16 %v456, %v443
        %v548 = vpack.c.b16 %v457, %v444
        %v549 = vpack.c.b16 %v458, %v445
        %v550 = vpack.c.b16 %v459, %v446
        %v551 = vpack.c.b16 %v460, %v447
        %v552 = vpack.c.b16 %v461, %v448
        %v553 = vpack.c.b16 %v462, %v449
        %v554 = vpack.c.b16 %v463, %v450
        %v555 = vpack.c.b16 %v464, %v451
        %v556 = vpack.c.b16 %v465, %v452
        %v557 = vpack.c.b16 %v466, %v453
        %v558 = vpack.c.b16 %v480, %v467
        %v559 = vpack.c.b16 %v481, %v468
        %v560 = vpack.c.b16 %v482, %v469
        %v561 = vpack.c.b16 %v483, %v470
        %v562 = vpack.c.b16 %v484, %v471
        %v563 = vpack.c.b16 %v485, %v472
        %v564 = vpack.c.b16 %v486, %v473
        %v565 = vpack.c.b16 %v487, %v474
        %v566 = vpack.c.b16 %v488, %v475
        %v567 = vpack.c.b16 %v489, %v476
        %v568 = vpack.c.b16 %v490, %v477
        %v569 = vpack.c.b16 %v491, %v478
        %v570 = vpack.c.b16 %v492, %v479
        %v571 = vpack.c.b16 %v506, %v493
        %v572 = vpack.c.b16 %v507, %v494
        %v573 = vpack.c.b16 %v508, %v495
        %v574 = vpack.c.b16 %v509, %v496
        %v575 = vpack.c.b16 %v510, %v497
        %v576 = vpack.c.b16 %v511, %v498
        %v577 = vpack.c.b16 %v512, %v499
        %v578 = vpack.c.b16 %v513, %v500
        %v579 = vpack.c.b16 %v514, %v501
        %v580 = vpack.c.b16 %v515, %v502
        %v581 = vpack.c.b16 %v516, %v503
        %v582 = vpack.c.b16 %v517, %v504
        %v583 = vpack.c.b16 %v518, %v505
        %vm636 = vcmask 613376
        %v638 = vsel %vm636, %v316, 0
        %v641 = vsel %vm636, %v317, 0
        %v644 = vsel %vm636, %v318, 0
        %vm646 = vcmask 1044480
        %vm647 = vcmask 1045504
        %v648 = vsel %vm646, 4294967295, 65535
        %v649 = vsel %vm647, %v648, 0
        %v651 = vand.u32 %v571, %v649
        %v654 = vand.u32 %v572, %v649
        %v657 = vand.u32 %v573, %v649
        %v660 = vand.u32 %v574, %v649
        %v663 = vand.u32 %v575, %v649
        %v666 = vand.u32 %v576, %v649
        %v669 = vand.u32 %v577, %v649
        %v672 = vand.u32 %v578, %v649
        %v675 = vand.u32 %v579, %v649
        %v678 = vand.u32 %v580, %v649
        %v681 = vand.u32 %v581, %v649
        %v684 = vand.u32 %v582, %v649
        %v687 = vand.u32 %v583, %v649
        %689 = vmatprep.subr.bf16.mxu0 0
        %690 = vmatpush1.bf16.msra.mxu0 0
        %691 = vmatprep.subr.bf16.mxu0 0
        %692 = vmatpush1.bf16.msra.mxu0 0
        %693 = vmatprep.subr.bf16.mxu0 0
        %694 = vmatpush1.bf16.msra.mxu0 0
        %695 = vmatprep.subr.bf16.mxu0 %v654
        %696 = vmatpush1.bf16.msra.mxu0 %v651
        %697 = vmatprep.subr.bf16.mxu0 %v559
        %698 = vmatpush1.bf16.msra.mxu0 %v558
        %699 = vmatprep.subr.bf16.mxu0 %v546
        %700 = vmatpush1.bf16.msra.mxu0 %v545
        %701 = vmatprep.subr.bf16.mxu0 %v533
        %702 = vmatpush1.bf16.msra.mxu0 %v532
        %703 = vmatprep.subr.bf16.mxu0 %v520
        %704 = vmatpush1.bf16.msra.mxu0 %v519
        %705 = vmatprep.subr.bf16.mxu0 0
        %706 = vmatpush2.bf16.msra.mxu0 0
        %707 = vmatprep.subr.bf16.mxu0 0
        %708 = vmatpush2.bf16.msra.mxu0 0
        %709 = vmatprep.subr.bf16.mxu0 0
        %710 = vmatpush2.bf16.msra.mxu0 0
        %711 = vmatprep.subr.bf16.mxu0 0
        %712 = vmatpush2.bf16.msra.mxu0 0
        %713 = vmatprep.subr.bf16.mxu0 0
        %714 = vmatpush2.bf16.msra.mxu0 0
        %715 = vmatprep.subr.bf16.mxu0 0
        %716 = vmatpush2.bf16.msra.mxu0 0
        %717 = vmatprep.subr.bf16.mxu0 0
        %718 = vmatpush2.bf16.msra.mxu0 0
        %719 = vmatprep.subr.bf16.mxu0 0
        %720 = vmatpush2.bf16.msra.mxu0 0
        %721 = vmatprep.mubr.bf16.mxu0 0
        %722 = vmatmul.mubr.bf16.gmra.mxu0 %v638
        %v723 = vpop.f32.mrf.mxu0
        %v724 = vadd.f32 %v284, %v723
        %v725 = vpop.f32.mrf.mxu0
        %v726 = vadd.f32 %v284, %v725
        %v727 = vpop.f32.mrf.mxu0
        %v728 = vadd.f32 %v289, %v727
        %v729 = vpop.f32.mrf.mxu0
        %v730 = vadd.f32 %v289, %v729
        %731 = vmatprep.mubr.bf16.mxu0 0
        %732 = vmatmul.mubr.bf16.gmra.mxu0 %v641
        %v733 = vpop.f32.mrf.mxu0
        %v734 = vadd.f32 %v294, %v733
        %v735 = vpop.f32.mrf.mxu0
        %v736 = vadd.f32 %v294, %v735
        %v737 = vpop.f32.mrf.mxu0
        %v738 = vadd.f32 %v299, %v737
        %v739 = vpop.f32.mrf.mxu0
        %v740 = vadd.f32 %v299, %v739
        %741 = vmatprep.mubr.bf16.mxu0 0
        %742 = vmatmul.mubr.bf16.gmra.mxu0 %v644
        %v743 = vpop.f32.mrf.mxu0
        %v744 = vadd.f32 %v304, %v743
        %v745 = vpop.f32.mrf.mxu0
        %v746 = vadd.f32 %v304, %v745
        %v747 = vpop.f32.mrf.mxu0
        %v748 = vpop.f32.mrf.mxu0
        %749 = vdwg.mxu0
        %750 = vmatprep.subr.bf16.mxu0 0
        %751 = vmatpush1.bf16.msra.mxu0 0
        %752 = vmatprep.subr.bf16.mxu0 0
        %753 = vmatpush1.bf16.msra.mxu0 0
        %754 = vmatprep.subr.bf16.mxu0 0
        %755 = vmatpush1.bf16.msra.mxu0 0
        %756 = vmatprep.subr.bf16.mxu0 %v660
        %757 = vmatpush1.bf16.msra.mxu0 %v657
        %758 = vmatprep.subr.bf16.mxu0 %v561
        %759 = vmatpush1.bf16.msra.mxu0 %v560
        %760 = vmatprep.subr.bf16.mxu0 %v548
        %761 = vmatpush1.bf16.msra.mxu0 %v547
        %762 = vmatprep.subr.bf16.mxu0 %v535
        %763 = vmatpush1.bf16.msra.mxu0 %v534
        %764 = vmatprep.subr.bf16.mxu0 %v522
        %765 = vmatpush1.bf16.msra.mxu0 %v521
        %766 = vmatprep.subr.bf16.mxu0 0
        %767 = vmatpush2.bf16.msra.mxu0 0
        %768 = vmatprep.subr.bf16.mxu0 0
        %769 = vmatpush2.bf16.msra.mxu0 0
        %770 = vmatprep.subr.bf16.mxu0 0
        %771 = vmatpush2.bf16.msra.mxu0 0
        %772 = vmatprep.subr.bf16.mxu0 0
        %773 = vmatpush2.bf16.msra.mxu0 0
        %774 = vmatprep.subr.bf16.mxu0 0
        %775 = vmatpush2.bf16.msra.mxu0 0
        %776 = vmatprep.subr.bf16.mxu0 0
        %777 = vmatpush2.bf16.msra.mxu0 0
        %778 = vmatprep.subr.bf16.mxu0 0
        %779 = vmatpush2.bf16.msra.mxu0 0
        %780 = vmatprep.subr.bf16.mxu0 0
        %781 = vmatpush2.bf16.msra.mxu0 0
        %782 = vmatprep.mubr.bf16.mxu0 0
        %783 = vmatmul.mubr.bf16.gmra.mxu0 %v638
        %v784 = vpop.f32.mrf.mxu0
        %v785 = vadd.f32 %v284, %v784
        %v786 = vpop.f32.mrf.mxu0
        %v787 = vadd.f32 %v284, %v786
        %v788 = vpop.f32.mrf.mxu0
        %v789 = vadd.f32 %v289, %v788
        %v790 = vpop.f32.mrf.mxu0
        %v791 = vadd.f32 %v289, %v790
        %792 = vmatprep.mubr.bf16.mxu0 0
        %793 = vmatmul.mubr.bf16.gmra.mxu0 %v641
        %v794 = vpop.f32.mrf.mxu0
        %v795 = vadd.f32 %v294, %v794
        %v796 = vpop.f32.mrf.mxu0
        %v797 = vadd.f32 %v294, %v796
        %v798 = vpop.f32.mrf.mxu0
        %v799 = vadd.f32 %v299, %v798
        %v800 = vpop.f32.mrf.mxu0
        %v801 = vadd.f32 %v299, %v800
        %802 = vmatprep.mubr.bf16.mxu0 0
        %803 = vmatmul.mubr.bf16.gmra.mxu0 %v644
        %v804 = vpop.f32.mrf.mxu0
        %v805 = vadd.f32 %v304, %v804
        %v806 = vpop.f32.mrf.mxu0
        %v807 = vadd.f32 %v304, %v806
        %v808 = vpop.f32.mrf.mxu0
        %v809 = vpop.f32.mrf.mxu0
        %810 = vdwg.mxu0
        %811 = vmatprep.subr.bf16.mxu0 0
        %812 = vmatpush1.bf16.msra.mxu0 0
        %813 = vmatprep.subr.bf16.mxu0 0
        %814 = vmatpush1.bf16.msra.mxu0 0
        %815 = vmatprep.subr.bf16.mxu0 0
        %816 = vmatpush1.bf16.msra.mxu0 0
        %817 = vmatprep.subr.bf16.mxu0 %v666
        %818 = vmatpush1.bf16.msra.mxu0 %v663
        %819 = vmatprep.subr.bf16.mxu0 %v563
        %820 = vmatpush1.bf16.msra.mxu0 %v562
        %821 = vmatprep.subr.bf16.mxu0 %v550
        %822 = vmatpush1.bf16.msra.mxu0 %v549
        %823 = vmatprep.subr.bf16.mxu0 %v537
        %824 = vmatpush1.bf16.msra.mxu0 %v536
        %825 = vmatprep.subr.bf16.mxu0 %v524
        %826 = vmatpush1.bf16.msra.mxu0 %v523
        %827 = vmatprep.subr.bf16.mxu0 0
        %828 = vmatpush2.bf16.msra.mxu0 0
        %829 = vmatprep.subr.bf16.mxu0 0
        %830 = vmatpush2.bf16.msra.mxu0 0
        %831 = vmatprep.subr.bf16.mxu0 0
        %832 = vmatpush2.bf16.msra.mxu0 0
        %833 = vmatprep.subr.bf16.mxu0 0
        %834 = vmatpush2.bf16.msra.mxu0 0
        %835 = vmatprep.subr.bf16.mxu0 0
        %836 = vmatpush2.bf16.msra.mxu0 0
        %837 = vmatprep.subr.bf16.mxu0 0
        %838 = vmatpush2.bf16.msra.mxu0 0
        %839 = vmatprep.subr.bf16.mxu0 0
        %840 = vmatpush2.bf16.msra.mxu0 0
        %841 = vmatprep.subr.bf16.mxu0 0
        %842 = vmatpush2.bf16.msra.mxu0 0
        %843 = vmatprep.mubr.bf16.mxu0 0
        %844 = vmatmul.mubr.bf16.gmra.mxu0 %v638
        %v845 = vpop.f32.mrf.mxu0
        %v846 = vadd.f32 %v284, %v845
        %v847 = vpop.f32.mrf.mxu0
        %v848 = vadd.f32 %v284, %v847
        %v849 = vpop.f32.mrf.mxu0
        %v850 = vadd.f32 %v289, %v849
        %v851 = vpop.f32.mrf.mxu0
        %v852 = vadd.f32 %v289, %v851
        %853 = vmatprep.mubr.bf16.mxu0 0
        %854 = vmatmul.mubr.bf16.gmra.mxu0 %v641
        %v855 = vpop.f32.mrf.mxu0
        %v856 = vadd.f32 %v294, %v855
        %v857 = vpop.f32.mrf.mxu0
        %v858 = vadd.f32 %v294, %v857
        %v859 = vpop.f32.mrf.mxu0
        %v860 = vadd.f32 %v299, %v859
        %v861 = vpop.f32.mrf.mxu0
        %v862 = vadd.f32 %v299, %v861
        %863 = vmatprep.mubr.bf16.mxu0 0
        %864 = vmatmul.mubr.bf16.gmra.mxu0 %v644
        %v865 = vpop.f32.mrf.mxu0
        %v866 = vadd.f32 %v304, %v865
        %v867 = vpop.f32.mrf.mxu0
        %v868 = vadd.f32 %v304, %v867
        %v869 = vpop.f32.mrf.mxu0
        %v870 = vpop.f32.mrf.mxu0
        %871 = vdwg.mxu0
        %872 = vmatprep.subr.bf16.mxu0 0
        %873 = vmatpush1.bf16.msra.mxu0 0
        %874 = vmatprep.subr.bf16.mxu0 0
        %875 = vmatpush1.bf16.msra.mxu0 0
        %876 = vmatprep.subr.bf16.mxu0 0
        %877 = vmatpush1.bf16.msra.mxu0 0
        %878 = vmatprep.subr.bf16.mxu0 %v672
        %879 = vmatpush1.bf16.msra.mxu0 %v669
        %880 = vmatprep.subr.bf16.mxu0 %v565
        %881 = vmatpush1.bf16.msra.mxu0 %v564
        %882 = vmatprep.subr.bf16.mxu0 %v552
        %883 = vmatpush1.bf16.msra.mxu0 %v551
        %884 = vmatprep.subr.bf16.mxu0 %v539
        %885 = vmatpush1.bf16.msra.mxu0 %v538
        %886 = vmatprep.subr.bf16.mxu0 %v526
        %887 = vmatpush1.bf16.msra.mxu0 %v525
        %888 = vmatprep.subr.bf16.mxu0 0
        %889 = vmatpush2.bf16.msra.mxu0 0
        %890 = vmatprep.subr.bf16.mxu0 0
        %891 = vmatpush2.bf16.msra.mxu0 0
        %892 = vmatprep.subr.bf16.mxu0 0
        %893 = vmatpush2.bf16.msra.mxu0 0
        %894 = vmatprep.subr.bf16.mxu0 0
        %895 = vmatpush2.bf16.msra.mxu0 0
        %896 = vmatprep.subr.bf16.mxu0 0
        %897 = vmatpush2.bf16.msra.mxu0 0
        %898 = vmatprep.subr.bf16.mxu0 0
        %899 = vmatpush2.bf16.msra.mxu0 0
        %900 = vmatprep.subr.bf16.mxu0 0
        %901 = vmatpush2.bf16.msra.mxu0 0
        %902 = vmatprep.subr.bf16.mxu0 0
        %903 = vmatpush2.bf16.msra.mxu0 0
        %904 = vmatprep.mubr.bf16.mxu0 0
        %905 = vmatmul.mubr.bf16.gmra.mxu0 %v638
        %v906 = vpop.f32.mrf.mxu0
        %v907 = vadd.f32 %v284, %v906
        %v908 = vpop.f32.mrf.mxu0
        %v909 = vadd.f32 %v284, %v908
        %v910 = vpop.f32.mrf.mxu0
        %v911 = vadd.f32 %v289, %v910
        %v912 = vpop.f32.mrf.mxu0
        %v913 = vadd.f32 %v289, %v912
        %914 = vmatprep.mubr.bf16.mxu0 0
        %915 = vmatmul.mubr.bf16.gmra.mxu0 %v641
        %v916 = vpop.f32.mrf.mxu0
        %v917 = vadd.f32 %v294, %v916
        %v918 = vpop.f32.mrf.mxu0
        %v919 = vadd.f32 %v294, %v918
        %v920 = vpop.f32.mrf.mxu0
        %v921 = vadd.f32 %v299, %v920
        %v922 = vpop.f32.mrf.mxu0
        %v923 = vadd.f32 %v299, %v922
        %924 = vmatprep.mubr.bf16.mxu0 0
        %925 = vmatmul.mubr.bf16.gmra.mxu0 %v644
        %v926 = vpop.f32.mrf.mxu0
        %v927 = vadd.f32 %v304, %v926
        %v928 = vpop.f32.mrf.mxu0
        %v929 = vadd.f32 %v304, %v928
        %v930 = vpop.f32.mrf.mxu0
        %v931 = vpop.f32.mrf.mxu0
        %932 = vdwg.mxu0
        %933 = vmatprep.subr.bf16.mxu0 0
        %934 = vmatpush1.bf16.msra.mxu0 0
        %935 = vmatprep.subr.bf16.mxu0 0
        %936 = vmatpush1.bf16.msra.mxu0 0
        %937 = vmatprep.subr.bf16.mxu0 0
        %938 = vmatpush1.bf16.msra.mxu0 0
        %939 = vmatprep.subr.bf16.mxu0 %v678
        %940 = vmatpush1.bf16.msra.mxu0 %v675
        %941 = vmatprep.subr.bf16.mxu0 %v567
        %942 = vmatpush1.bf16.msra.mxu0 %v566
        %943 = vmatprep.subr.bf16.mxu0 %v554
        %944 = vmatpush1.bf16.msra.mxu0 %v553
        %945 = vmatprep.subr.bf16.mxu0 %v541
        %946 = vmatpush1.bf16.msra.mxu0 %v540
        %947 = vmatprep.subr.bf16.mxu0 %v528
        %948 = vmatpush1.bf16.msra.mxu0 %v527
        %949 = vmatprep.subr.bf16.mxu0 0
        %950 = vmatpush2.bf16.msra.mxu0 0
        %951 = vmatprep.subr.bf16.mxu0 0
        %952 = vmatpush2.bf16.msra.mxu0 0
        %953 = vmatprep.subr.bf16.mxu0 0
        %954 = vmatpush2.bf16.msra.mxu0 0
        %955 = vmatprep.subr.bf16.mxu0 0
        %956 = vmatpush2.bf16.msra.mxu0 0
        %957 = vmatprep.subr.bf16.mxu0 0
        %958 = vmatpush2.bf16.msra.mxu0 0
        %959 = vmatprep.subr.bf16.mxu0 0
        %960 = vmatpush2.bf16.msra.mxu0 0
        %961 = vmatprep.subr.bf16.mxu0 0
        %962 = vmatpush2.bf16.msra.mxu0 0
        %963 = vmatprep.subr.bf16.mxu0 0
        %964 = vmatpush2.bf16.msra.mxu0 0
        %965 = vmatprep.mubr.bf16.mxu0 0
        %966 = vmatmul.mubr.bf16.gmra.mxu0 %v638
        %v967 = vpop.f32.mrf.mxu0
        %v968 = vadd.f32 %v284, %v967
        %v969 = vpop.f32.mrf.mxu0
        %v970 = vadd.f32 %v284, %v969
        %v971 = vpop.f32.mrf.mxu0
        %v972 = vadd.f32 %v289, %v971
        %v973 = vpop.f32.mrf.mxu0
        %v974 = vadd.f32 %v289, %v973
        %975 = vmatprep.mubr.bf16.mxu0 0
        %976 = vmatmul.mubr.bf16.gmra.mxu0 %v641
        %v977 = vpop.f32.mrf.mxu0
        %v978 = vadd.f32 %v294, %v977
        %v979 = vpop.f32.mrf.mxu0
        %v980 = vadd.f32 %v294, %v979
        %v981 = vpop.f32.mrf.mxu0
        %v982 = vadd.f32 %v299, %v981
        %v983 = vpop.f32.mrf.mxu0
        %v984 = vadd.f32 %v299, %v983
        %985 = vmatprep.mubr.bf16.mxu0 0
        %986 = vmatmul.mubr.bf16.gmra.mxu0 %v644
        %v987 = vpop.f32.mrf.mxu0
        %v988 = vadd.f32 %v304, %v987
        %v989 = vpop.f32.mrf.mxu0
        %v990 = vadd.f32 %v304, %v989
        %v991 = vpop.f32.mrf.mxu0
        %v992 = vpop.f32.mrf.mxu0
        %993 = vdwg.mxu0
        %994 = vmatprep.subr.bf16.mxu0 0
        %995 = vmatpush1.bf16.msra.mxu0 0
        %996 = vmatprep.subr.bf16.mxu0 0
        %997 = vmatpush1.bf16.msra.mxu0 0
        %998 = vmatprep.subr.bf16.mxu0 0
        %999 = vmatpush1.bf16.msra.mxu0 0
        %1000 = vmatprep.subr.bf16.mxu0 %v684
        %1001 = vmatpush1.bf16.msra.mxu0 %v681
        %1002 = vmatprep.subr.bf16.mxu0 %v569
        %1003 = vmatpush1.bf16.msra.mxu0 %v568
        %1004 = vmatprep.subr.bf16.mxu0 %v556
        %1005 = vmatpush1.bf16.msra.mxu0 %v555
        %1006 = vmatprep.subr.bf16.mxu0 %v543
        %1007 = vmatpush1.bf16.msra.mxu0 %v542
        %1008 = vmatprep.subr.bf16.mxu0 %v530
        %1009 = vmatpush1.bf16.msra.mxu0 %v529
        %1010 = vmatprep.subr.bf16.mxu0 0
        %1011 = vmatpush2.bf16.msra.mxu0 0
        %1012 = vmatprep.subr.bf16.mxu0 0
        %1013 = vmatpush2.bf16.msra.mxu0 0
        %1014 = vmatprep.subr.bf16.mxu0 0
        %1015 = vmatpush2.bf16.msra.mxu0 0
        %1016 = vmatprep.subr.bf16.mxu0 0
        %1017 = vmatpush2.bf16.msra.mxu0 0
        %1018 = vmatprep.subr.bf16.mxu0 0
        %1019 = vmatpush2.bf16.msra.mxu0 0
        %1020 = vmatprep.subr.bf16.mxu0 0
        %1021 = vmatpush2.bf16.msra.mxu0 0
        %1022 = vmatprep.subr.bf16.mxu0 0
        %1023 = vmatpush2.bf16.msra.mxu0 0
        %1024 = vmatprep.subr.bf16.mxu0 0
        %1025 = vmatpush2.bf16.msra.mxu0 0
        %1026 = vmatprep.mubr.bf16.mxu0 0
        %1027 = vmatmul.mubr.bf16.gmra.mxu0 %v638
        %v1028 = vpop.f32.mrf.mxu0
        %v1029 = vadd.f32 %v284, %v1028
        %v1030 = vpop.f32.mrf.mxu0
        %v1031 = vadd.f32 %v284, %v1030
        %v1032 = vpop.f32.mrf.mxu0
        %v1033 = vadd.f32 %v289, %v1032
        %v1034 = vpop.f32.mrf.mxu0
        %v1035 = vadd.f32 %v289, %v1034
        %1036 = vmatprep.mubr.bf16.mxu0 0
        %1037 = vmatmul.mubr.bf16.gmra.mxu0 %v641
        %v1038 = vpop.f32.mrf.mxu0
        %v1039 = vadd.f32 %v294, %v1038
        %v1040 = vpop.f32.mrf.mxu0
        %v1041 = vadd.f32 %v294, %v1040
        %v1042 = vpop.f32.mrf.mxu0
        %v1043 = vadd.f32 %v299, %v1042
        %v1044 = vpop.f32.mrf.mxu0
        %v1045 = vadd.f32 %v299, %v1044
        %1046 = vmatprep.mubr.bf16.mxu0 0
        %1047 = vmatmul.mubr.bf16.gmra.mxu0 %v644
        %v1048 = vpop.f32.mrf.mxu0
        %v1049 = vadd.f32 %v304, %v1048
        %v1050 = vpop.f32.mrf.mxu0
        %v1051 = vadd.f32 %v304, %v1050
        %v1052 = vpop.f32.mrf.mxu0
        %v1053 = vpop.f32.mrf.mxu0
        %1054 = vdwg.mxu0
        %1055 = vmatprep.subr.bf16.mxu0 0
        %1056 = vmatpush1.bf16.msra.mxu0 0
        %1057 = vmatprep.subr.bf16.mxu0 0
        %1058 = vmatpush1.bf16.msra.mxu0 0
        %1059 = vmatprep.subr.bf16.mxu0 0
        %1060 = vmatpush1.bf16.msra.mxu0 0
        %1061 = vmatprep.subr.bf16.mxu0 0
        %1062 = vmatpush1.bf16.msra.mxu0 %v687
        %1063 = vmatprep.subr.bf16.mxu0 0
        %1064 = vmatpush1.bf16.msra.mxu0 %v570
        %1065 = vmatprep.subr.bf16.mxu0 0
        %1066 = vmatpush1.bf16.msra.mxu0 %v557
        %1067 = vmatprep.subr.bf16.mxu0 0
        %1068 = vmatpush1.bf16.msra.mxu0 %v544
        %1069 = vmatprep.subr.bf16.mxu0 0
        %1070 = vmatpush1.bf16.msra.mxu0 %v531
        %1071 = vmatprep.subr.bf16.mxu0 0
        %1072 = vmatpush2.bf16.msra.mxu0 0
        %1073 = vmatprep.subr.bf16.mxu0 0
        %1074 = vmatpush2.bf16.msra.mxu0 0
        %1075 = vmatprep.subr.bf16.mxu0 0
        %1076 = vmatpush2.bf16.msra.mxu0 0
        %1077 = vmatprep.subr.bf16.mxu0 0
        %1078 = vmatpush2.bf16.msra.mxu0 0
        %1079 = vmatprep.subr.bf16.mxu0 0
        %1080 = vmatpush2.bf16.msra.mxu0 0
        %1081 = vmatprep.subr.bf16.mxu0 0
        %1082 = vmatpush2.bf16.msra.mxu0 0
        %1083 = vmatprep.subr.bf16.mxu0 0
        %1084 = vmatpush2.bf16.msra.mxu0 0
        %1085 = vmatprep.subr.bf16.mxu0 0
        %1086 = vmatpush2.bf16.msra.mxu0 0
        %1087 = vmatprep.mubr.bf16.mxu0 0
        %1088 = vmatmul.mubr.bf16.gmra.mxu0 %v638
        %v1089 = vpop.f32.mrf.mxu0
        %v1090 = vadd.f32 %v284, %v1089
        %v1091 = vpop.f32.mrf.mxu0
        %v1092 = vpop.f32.mrf.mxu0
        %v1093 = vadd.f32 %v289, %v1092
        %v1094 = vpop.f32.mrf.mxu0
        %1095 = vmatprep.mubr.bf16.mxu0 0
        %1096 = vmatmul.mubr.bf16.gmra.mxu0 %v641
        %v1097 = vpop.f32.mrf.mxu0
        %v1098 = vadd.f32 %v294, %v1097
        %v1099 = vpop.f32.mrf.mxu0
        %v1100 = vpop.f32.mrf.mxu0
        %v1101 = vadd.f32 %v299, %v1100
        %v1102 = vpop.f32.mrf.mxu0
        %1103 = vmatprep.mubr.bf16.mxu0 0
        %1104 = vmatmul.mubr.bf16.gmra.mxu0 %v644
        %v1105 = vpop.f32.mrf.mxu0
        %v1106 = vadd.f32 %v304, %v1105
        %v1107 = vpop.f32.mrf.mxu0
        %v1108 = vpop.f32.mrf.mxu0
        %v1109 = vpop.f32.mrf.mxu0
        %1110 = vdwg.mxu0
        %vm1111 = vcmp.gt.f32.partialorder %v724, 0.0
        %vm1112 = vcmp.gt.f32.partialorder %v726, 0.0
        %vm1113 = vcmp.gt.f32.partialorder %v785, 0.0
        %vm1114 = vcmp.gt.f32.partialorder %v787, 0.0
        %vm1115 = vcmp.gt.f32.partialorder %v846, 0.0
        %vm1116 = vcmp.gt.f32.partialorder %v848, 0.0
        %vm1117 = vcmp.gt.f32.partialorder %v907, 0.0
        %vm1118 = vcmp.gt.f32.partialorder %v909, 0.0
        %vm1119 = vcmp.gt.f32.partialorder %v968, 0.0
        %vm1120 = vcmp.gt.f32.partialorder %v970, 0.0
        %vm1121 = vcmp.gt.f32.partialorder %v1029, 0.0
        %vm1122 = vcmp.gt.f32.partialorder %v1031, 0.0
        %vm1123 = vcmp.gt.f32.partialorder %v1090, 0.0
        %vm1124 = vcmp.gt.f32.partialorder %v728, 0.0
        %vm1125 = vcmp.gt.f32.partialorder %v730, 0.0
        %vm1126 = vcmp.gt.f32.partialorder %v789, 0.0
        %vm1127 = vcmp.gt.f32.partialorder %v791, 0.0
        %vm1128 = vcmp.gt.f32.partialorder %v850, 0.0
        %vm1129 = vcmp.gt.f32.partialorder %v852, 0.0
        %vm1130 = vcmp.gt.f32.partialorder %v911, 0.0
        %vm1131 = vcmp.gt.f32.partialorder %v913, 0.0
        %vm1132 = vcmp.gt.f32.partialorder %v972, 0.0
        %vm1133 = vcmp.gt.f32.partialorder %v974, 0.0
        %vm1134 = vcmp.gt.f32.partialorder %v1033, 0.0
        %vm1135 = vcmp.gt.f32.partialorder %v1035, 0.0
        %vm1136 = vcmp.gt.f32.partialorder %v1093, 0.0
        %vm1137 = vcmp.gt.f32.partialorder %v734, 0.0
        %vm1138 = vcmp.gt.f32.partialorder %v736, 0.0
        %vm1139 = vcmp.gt.f32.partialorder %v795, 0.0
        %vm1140 = vcmp.gt.f32.partialorder %v797, 0.0
        %vm1141 = vcmp.gt.f32.partialorder %v856, 0.0
        %vm1142 = vcmp.gt.f32.partialorder %v858, 0.0
        %vm1143 = vcmp.gt.f32.partialorder %v917, 0.0
        %vm1144 = vcmp.gt.f32.partialorder %v919, 0.0
        %vm1145 = vcmp.gt.f32.partialorder %v978, 0.0
        %vm1146 = vcmp.gt.f32.partialorder %v980, 0.0
        %vm1147 = vcmp.gt.f32.partialorder %v1039, 0.0
        %vm1148 = vcmp.gt.f32.partialorder %v1041, 0.0
        %vm1149 = vcmp.gt.f32.partialorder %v1098, 0.0
        %vm1150 = vcmp.gt.f32.partialorder %v738, 0.0
        %vm1151 = vcmp.gt.f32.partialorder %v740, 0.0
        %vm1152 = vcmp.gt.f32.partialorder %v799, 0.0
        %vm1153 = vcmp.gt.f32.partialorder %v801, 0.0
        %vm1154 = vcmp.gt.f32.partialorder %v860, 0.0
        %vm1155 = vcmp.gt.f32.partialorder %v862, 0.0
        %vm1156 = vcmp.gt.f32.partialorder %v921, 0.0
        %vm1157 = vcmp.gt.f32.partialorder %v923, 0.0
        %vm1158 = vcmp.gt.f32.partialorder %v982, 0.0
        %vm1159 = vcmp.gt.f32.partialorder %v984, 0.0
        %vm1160 = vcmp.gt.f32.partialorder %v1043, 0.0
        %vm1161 = vcmp.gt.f32.partialorder %v1045, 0.0
        %vm1162 = vcmp.gt.f32.partialorder %v1101, 0.0
        %vm1163 = vcmp.gt.f32.partialorder %v744, 0.0
        %vm1164 = vcmp.gt.f32.partialorder %v746, 0.0
        %vm1165 = vcmp.gt.f32.partialorder %v805, 0.0
        %vm1166 = vcmp.gt.f32.partialorder %v807, 0.0
        %vm1167 = vcmp.gt.f32.partialorder %v866, 0.0
        %vm1168 = vcmp.gt.f32.partialorder %v868, 0.0
        %vm1169 = vcmp.gt.f32.partialorder %v927, 0.0
        %vm1170 = vcmp.gt.f32.partialorder %v929, 0.0
        %vm1171 = vcmp.gt.f32.partialorder %v988, 0.0
        %vm1172 = vcmp.gt.f32.partialorder %v990, 0.0
        %vm1173 = vcmp.gt.f32.partialorder %v1049, 0.0
        %vm1174 = vcmp.gt.f32.partialorder %v1051, 0.0
        %vm1175 = vcmp.gt.f32.partialorder %v1106, 0.0
        %v1176 = vmin.f32 %v724, 0.0
        %v1177 = vmin.f32 %v726, 0.0
        %v1178 = vmin.f32 %v785, 0.0
        %v1179 = vmin.f32 %v787, 0.0
        %v1180 = vmin.f32 %v846, 0.0
        %v1181 = vmin.f32 %v848, 0.0
        %v1182 = vmin.f32 %v907, 0.0
        %v1183 = vmin.f32 %v909, 0.0
        %v1184 = vmin.f32 %v968, 0.0
        %v1185 = vmin.f32 %v970, 0.0
        %v1186 = vmin.f32 %v1029, 0.0
        %v1187 = vmin.f32 %v1031, 0.0
        %v1188 = vmin.f32 %v1090, 0.0
        %v1189 = vmin.f32 %v728, 0.0
        %v1190 = vmin.f32 %v730, 0.0
        %v1191 = vmin.f32 %v789, 0.0
        %v1192 = vmin.f32 %v791, 0.0
        %v1193 = vmin.f32 %v850, 0.0
        %v1194 = vmin.f32 %v852, 0.0
        %v1195 = vmin.f32 %v911, 0.0
        %v1196 = vmin.f32 %v913, 0.0
        %v1197 = vmin.f32 %v972, 0.0
        %v1198 = vmin.f32 %v974, 0.0
        %v1199 = vmin.f32 %v1033, 0.0
        %v1200 = vmin.f32 %v1035, 0.0
        %v1201 = vmin.f32 %v1093, 0.0
        %v1202 = vmin.f32 %v734, 0.0
        %v1203 = vmin.f32 %v736, 0.0
        %v1204 = vmin.f32 %v795, 0.0
        %v1205 = vmin.f32 %v797, 0.0
        %v1206 = vmin.f32 %v856, 0.0
        %v1207 = vmin.f32 %v858, 0.0
        %v1208 = vmin.f32 %v917, 0.0
        %v1209 = vmin.f32 %v919, 0.0
        %v1210 = vmin.f32 %v978, 0.0
        %v1211 = vmin.f32 %v980, 0.0
        %v1212 = vmin.f32 %v1039, 0.0
        %v1213 = vmin.f32 %v1041, 0.0
        %v1214 = vmin.f32 %v1098, 0.0
        %v1215 = vmin.f32 %v738, 0.0
        %v1216 = vmin.f32 %v740, 0.0
        %v1217 = vmin.f32 %v799, 0.0
        %v1218 = vmin.f32 %v801, 0.0
        %v1219 = vmin.f32 %v860, 0.0
        %v1220 = vmin.f32 %v862, 0.0
        %v1221 = vmin.f32 %v921, 0.0
        %v1222 = vmin.f32 %v923, 0.0
        %v1223 = vmin.f32 %v982, 0.0
        %v1224 = vmin.f32 %v984, 0.0
        %v1225 = vmin.f32 %v1043, 0.0
        %v1226 = vmin.f32 %v1045, 0.0
        %v1227 = vmin.f32 %v1101, 0.0
        %v1228 = vmin.f32 %v744, 0.0
        %v1229 = vmin.f32 %v746, 0.0
        %v1230 = vmin.f32 %v805, 0.0
        %v1231 = vmin.f32 %v807, 0.0
        %v1232 = vmin.f32 %v866, 0.0
        %v1233 = vmin.f32 %v868, 0.0
        %v1234 = vmin.f32 %v927, 0.0
        %v1235 = vmin.f32 %v929, 0.0
        %v1236 = vmin.f32 %v988, 0.0
        %v1237 = vmin.f32 %v990, 0.0
        %v1238 = vmin.f32 %v1049, 0.0
        %v1239 = vmin.f32 %v1051, 0.0
        %v1240 = vmin.f32 %v1106, 0.0
        %v1241 = vmul.f32 %v1176, 1.442695
        %v1242 = vpow.pop %v1241
        %v1243 = vmul.f32 %v1177, 1.442695
        %v1244 = vpow.pop %v1243
        %v1245 = vmul.f32 %v1178, 1.442695
        %v1246 = vpow.pop %v1245
        %v1247 = vmul.f32 %v1179, 1.442695
        %v1248 = vpow.pop %v1247
        %v1249 = vmul.f32 %v1180, 1.442695
        %v1250 = vpow.pop %v1249
        %v1251 = vmul.f32 %v1181, 1.442695
        %v1252 = vpow.pop %v1251
        %v1253 = vmul.f32 %v1182, 1.442695
        %v1254 = vpow.pop %v1253
        %v1255 = vmul.f32 %v1183, 1.442695
        %v1256 = vpow.pop %v1255
        %v1257 = vmul.f32 %v1184, 1.442695
        %v1258 = vpow.pop %v1257
        %v1259 = vmul.f32 %v1185, 1.442695
        %v1260 = vpow.pop %v1259
        %v1261 = vmul.f32 %v1186, 1.442695
        %v1262 = vpow.pop %v1261
        %v1263 = vmul.f32 %v1187, 1.442695
        %v1264 = vpow.pop %v1263
        %v1265 = vmul.f32 %v1188, 1.442695
        %v1266 = vpow.pop %v1265
        %v1267 = vmul.f32 %v1189, 1.442695
        %v1268 = vpow.pop %v1267
        %v1269 = vmul.f32 %v1190, 1.442695
        %v1270 = vpow.pop %v1269
        %v1271 = vmul.f32 %v1191, 1.442695
        %v1272 = vpow.pop %v1271
        %v1273 = vmul.f32 %v1192, 1.442695
        %v1274 = vpow.pop %v1273
        %v1275 = vmul.f32 %v1193, 1.442695
        %v1276 = vpow.pop %v1275
        %v1277 = vmul.f32 %v1194, 1.442695
        %v1278 = vpow.pop %v1277
        %v1279 = vmul.f32 %v1195, 1.442695
        %v1280 = vpow.pop %v1279
        %v1281 = vmul.f32 %v1196, 1.442695
        %v1282 = vpow.pop %v1281
        %v1283 = vmul.f32 %v1197, 1.442695
        %v1284 = vpow.pop %v1283
        %v1285 = vmul.f32 %v1198, 1.442695
        %v1286 = vpow.pop %v1285
        %v1287 = vmul.f32 %v1199, 1.442695
        %v1288 = vpow.pop %v1287
        %v1289 = vmul.f32 %v1200, 1.442695
        %v1290 = vpow.pop %v1289
        %v1291 = vmul.f32 %v1201, 1.442695
        %v1292 = vpow.pop %v1291
        %v1293 = vmul.f32 %v1202, 1.442695
        %v1294 = vpow.pop %v1293
        %v1295 = vmul.f32 %v1203, 1.442695
        %v1296 = vpow.pop %v1295
        %v1297 = vmul.f32 %v1204, 1.442695
        %v1298 = vpow.pop %v1297
        %v1299 = vmul.f32 %v1205, 1.442695
        %v1300 = vpow.pop %v1299
        %v1301 = vmul.f32 %v1206, 1.442695
        %v1302 = vpow.pop %v1301
        %v1303 = vmul.f32 %v1207, 1.442695
        %v1304 = vpow.pop %v1303
        %v1305 = vmul.f32 %v1208, 1.442695
        %v1306 = vpow.pop %v1305
        %v1307 = vmul.f32 %v1209, 1.442695
        %v1308 = vpow.pop %v1307
        %v1309 = vmul.f32 %v1210, 1.442695
        %v1310 = vpow.pop %v1309
        %v1311 = vmul.f32 %v1211, 1.442695
        %v1312 = vpow.pop %v1311
        %v1313 = vmul.f32 %v1212, 1.442695
        %v1314 = vpow.pop %v1313
        %v1315 = vmul.f32 %v1213, 1.442695
        %v1316 = vpow.pop %v1315
        %v1317 = vmul.f32 %v1214, 1.442695
        %v1318 = vpow.pop %v1317
        %v1319 = vmul.f32 %v1215, 1.442695
        %v1320 = vpow.pop %v1319
        %v1321 = vmul.f32 %v1216, 1.442695
        %v1322 = vpow.pop %v1321
        %v1323 = vmul.f32 %v1217, 1.442695
        %v1324 = vpow.pop %v1323
        %v1325 = vmul.f32 %v1218, 1.442695
        %v1326 = vpow.pop %v1325
        %v1327 = vmul.f32 %v1219, 1.442695
        %v1328 = vpow.pop %v1327
        %v1329 = vmul.f32 %v1220, 1.442695
        %v1330 = vpow.pop %v1329
        %v1331 = vmul.f32 %v1221, 1.442695
        %v1332 = vpow.pop %v1331
        %v1333 = vmul.f32 %v1222, 1.442695
        %v1334 = vpow.pop %v1333
        %v1335 = vmul.f32 %v1223, 1.442695
        %v1336 = vpow.pop %v1335
        %v1337 = vmul.f32 %v1224, 1.442695
        %v1338 = vpow.pop %v1337
        %v1339 = vmul.f32 %v1225, 1.442695
        %v1340 = vpow.pop %v1339
        %v1341 = vmul.f32 %v1226, 1.442695
        %v1342 = vpow.pop %v1341
        %v1343 = vmul.f32 %v1227, 1.442695
        %v1344 = vpow.pop %v1343
        %v1345 = vmul.f32 %v1228, 1.442695
        %v1346 = vpow.pop %v1345
        %v1347 = vmul.f32 %v1229, 1.442695
        %v1348 = vpow.pop %v1347
        %v1349 = vmul.f32 %v1230, 1.442695
        %v1350 = vpow.pop %v1349
        %v1351 = vmul.f32 %v1231, 1.442695
        %v1352 = vpow.pop %v1351
        %v1353 = vmul.f32 %v1232, 1.442695
        %v1354 = vpow.pop %v1353
        %v1355 = vmul.f32 %v1233, 1.442695
        %v1356 = vpow.pop %v1355
        %v1357 = vmul.f32 %v1234, 1.442695
        %v1358 = vpow.pop %v1357
        %v1359 = vmul.f32 %v1235, 1.442695
        %v1360 = vpow.pop %v1359
        %v1361 = vmul.f32 %v1236, 1.442695
        %v1362 = vpow.pop %v1361
        %v1363 = vmul.f32 %v1237, 1.442695
        %v1364 = vpow.pop %v1363
        %v1365 = vmul.f32 %v1238, 1.442695
        %v1366 = vpow.pop %v1365
        %v1367 = vmul.f32 %v1239, 1.442695
        %v1368 = vpow.pop %v1367
        %v1369 = vmul.f32 %v1240, 1.442695
        %v1370 = vpow.pop %v1369
        %v1371 = vsub.f32 %v1242, 1.0
        %v1372 = vsub.f32 %v1244, 1.0
        %v1373 = vsub.f32 %v1246, 1.0
        %v1374 = vsub.f32 %v1248, 1.0
        %v1375 = vsub.f32 %v1250, 1.0
        %v1376 = vsub.f32 %v1252, 1.0
        %v1377 = vsub.f32 %v1254, 1.0
        %v1378 = vsub.f32 %v1256, 1.0
        %v1379 = vsub.f32 %v1258, 1.0
        %v1380 = vsub.f32 %v1260, 1.0
        %v1381 = vsub.f32 %v1262, 1.0
        %v1382 = vsub.f32 %v1264, 1.0
        %v1383 = vsub.f32 %v1266, 1.0
        %v1384 = vsub.f32 %v1268, 1.0
        %v1385 = vsub.f32 %v1270, 1.0
        %v1386 = vsub.f32 %v1272, 1.0
        %v1387 = vsub.f32 %v1274, 1.0
        %v1388 = vsub.f32 %v1276, 1.0
        %v1389 = vsub.f32 %v1278, 1.0
        %v1390 = vsub.f32 %v1280, 1.0
        %v1391 = vsub.f32 %v1282, 1.0
        %v1392 = vsub.f32 %v1284, 1.0
        %v1393 = vsub.f32 %v1286, 1.0
        %v1394 = vsub.f32 %v1288, 1.0
        %v1395 = vsub.f32 %v1290, 1.0
        %v1396 = vsub.f32 %v1292, 1.0
        %v1397 = vsub.f32 %v1294, 1.0
        %v1398 = vsub.f32 %v1296, 1.0
        %v1399 = vsub.f32 %v1298, 1.0
        %v1400 = vsub.f32 %v1300, 1.0
        %v1401 = vsub.f32 %v1302, 1.0
        %v1402 = vsub.f32 %v1304, 1.0
        %v1403 = vsub.f32 %v1306, 1.0
        %v1404 = vsub.f32 %v1308, 1.0
        %v1405 = vsub.f32 %v1310, 1.0
        %v1406 = vsub.f32 %v1312, 1.0
        %v1407 = vsub.f32 %v1314, 1.0
        %v1408 = vsub.f32 %v1316, 1.0
        %v1409 = vsub.f32 %v1318, 1.0
        %v1410 = vsub.f32 %v1320, 1.0
        %v1411 = vsub.f32 %v1322, 1.0
        %v1412 = vsub.f32 %v1324, 1.0
        %v1413 = vsub.f32 %v1326, 1.0
        %v1414 = vsub.f32 %v1328, 1.0
        %v1415 = vsub.f32 %v1330, 1.0
        %v1416 = vsub.f32 %v1332, 1.0
        %v1417 = vsub.f32 %v1334, 1.0
        %v1418 = vsub.f32 %v1336, 1.0
        %v1419 = vsub.f32 %v1338, 1.0
        %v1420 = vsub.f32 %v1340, 1.0
        %v1421 = vsub.f32 %v1342, 1.0
        %v1422 = vsub.f32 %v1344, 1.0
        %v1423 = vsub.f32 %v1346, 1.0
        %v1424 = vsub.f32 %v1348, 1.0
        %v1425 = vsub.f32 %v1350, 1.0
        %v1426 = vsub.f32 %v1352, 1.0
        %v1427 = vsub.f32 %v1354, 1.0
        %v1428 = vsub.f32 %v1356, 1.0
        %v1429 = vsub.f32 %v1358, 1.0
        %v1430 = vsub.f32 %v1360, 1.0
        %v1431 = vsub.f32 %v1362, 1.0
        %v1432 = vsub.f32 %v1364, 1.0
        %v1433 = vsub.f32 %v1366, 1.0
        %v1434 = vsub.f32 %v1368, 1.0
        %v1435 = vsub.f32 %v1370, 1.0
        %v1436 = vsel %vm1111, %v724, %v1371
        %v1437 = vsel %vm1112, %v726, %v1372
        %v1438 = vsel %vm1113, %v785, %v1373
        %v1439 = vsel %vm1114, %v787, %v1374
        %v1440 = vsel %vm1115, %v846, %v1375
        %v1441 = vsel %vm1116, %v848, %v1376
        %v1442 = vsel %vm1117, %v907, %v1377
        %v1443 = vsel %vm1118, %v909, %v1378
        %v1444 = vsel %vm1119, %v968, %v1379
        %v1445 = vsel %vm1120, %v970, %v1380
        %v1446 = vsel %vm1121, %v1029, %v1381
        %v1447 = vsel %vm1122, %v1031, %v1382
        %v1448 = vsel %vm1123, %v1090, %v1383
        %v1449 = vsel %vm1124, %v728, %v1384
        %v1450 = vsel %vm1125, %v730, %v1385
        %v1451 = vsel %vm1126, %v789, %v1386
        %v1452 = vsel %vm1127, %v791, %v1387
        %v1453 = vsel %vm1128, %v850, %v1388
        %v1454 = vsel %vm1129, %v852, %v1389
        %v1455 = vsel %vm1130, %v911, %v1390
        %v1456 = vsel %vm1131, %v913, %v1391
        %v1457 = vsel %vm1132, %v972, %v1392
        %v1458 = vsel %vm1133, %v974, %v1393
        %v1459 = vsel %vm1134, %v1033, %v1394
        %v1460 = vsel %vm1135, %v1035, %v1395
        %v1461 = vsel %vm1136, %v1093, %v1396
        %v1462 = vsel %vm1137, %v734, %v1397
        %v1463 = vsel %vm1138, %v736, %v1398
        %v1464 = vsel %vm1139, %v795, %v1399
        %v1465 = vsel %vm1140, %v797, %v1400
        %v1466 = vsel %vm1141, %v856, %v1401
        %v1467 = vsel %vm1142, %v858, %v1402
        %v1468 = vsel %vm1143, %v917, %v1403
        %v1469 = vsel %vm1144, %v919, %v1404
        %v1470 = vsel %vm1145, %v978, %v1405
        %v1471 = vsel %vm1146, %v980, %v1406
        %v1472 = vsel %vm1147, %v1039, %v1407
        %v1473 = vsel %vm1148, %v1041, %v1408
        %v1474 = vsel %vm1149, %v1098, %v1409
        %v1475 = vsel %vm1150, %v738, %v1410
        %v1476 = vsel %vm1151, %v740, %v1411
        %v1477 = vsel %vm1152, %v799, %v1412
        %v1478 = vsel %vm1153, %v801, %v1413
        %v1479 = vsel %vm1154, %v860, %v1414
        %v1480 = vsel %vm1155, %v862, %v1415
        %v1481 = vsel %vm1156, %v921, %v1416
        %v1482 = vsel %vm1157, %v923, %v1417
        %v1483 = vsel %vm1158, %v982, %v1418
        %v1484 = vsel %vm1159, %v984, %v1419
        %v1485 = vsel %vm1160, %v1043, %v1420
        %v1486 = vsel %vm1161, %v1045, %v1421
        %v1487 = vsel %vm1162, %v1101, %v1422
        %v1488 = vsel %vm1163, %v744, %v1423
        %v1489 = vsel %vm1164, %v746, %v1424
        %v1490 = vsel %vm1165, %v805, %v1425
        %v1491 = vsel %vm1166, %v807, %v1426
        %v1492 = vsel %vm1167, %v866, %v1427
        %v1493 = vsel %vm1168, %v868, %v1428
        %v1494 = vsel %vm1169, %v927, %v1429
        %v1495 = vsel %vm1170, %v929, %v1430
        %v1496 = vsel %vm1171, %v988, %v1431
        %v1497 = vsel %vm1172, %v990, %v1432
        %v1498 = vsel %vm1173, %v1049, %v1433
        %v1499 = vsel %vm1174, %v1051, %v1434
        %v1500 = vsel %vm1175, %v1106, %v1435
        %v1501 = vpack.c.bf16 %v1449, %v1436
        %v1502 = vpack.c.bf16 %v1450, %v1437
        %v1503 = vpack.c.bf16 %v1451, %v1438
        %v1504 = vpack.c.bf16 %v1452, %v1439
        %v1505 = vpack.c.bf16 %v1453, %v1440
        %v1506 = vpack.c.bf16 %v1454, %v1441
        %v1507 = vpack.c.bf16 %v1455, %v1442
        %v1508 = vpack.c.bf16 %v1456, %v1443
        %v1509 = vpack.c.bf16 %v1457, %v1444
        %v1510 = vpack.c.bf16 %v1458, %v1445
        %v1511 = vpack.c.bf16 %v1459, %v1446
        %v1512 = vpack.c.bf16 %v1460, %v1447
        %v1513 = vpack.c.bf16 %v1461, %v1448
        %v1514 = vpack.c.bf16 %v1475, %v1462
        %v1515 = vpack.c.bf16 %v1476, %v1463
        %v1516 = vpack.c.bf16 %v1477, %v1464
        %v1517 = vpack.c.bf16 %v1478, %v1465
        %v1518 = vpack.c.bf16 %v1479, %v1466
        %v1519 = vpack.c.bf16 %v1480, %v1467
        %v1520 = vpack.c.bf16 %v1481, %v1468
        %v1521 = vpack.c.bf16 %v1482, %v1469
        %v1522 = vpack.c.bf16 %v1483, %v1470
        %v1523 = vpack.c.bf16 %v1484, %v1471
        %v1524 = vpack.c.bf16 %v1485, %v1472
        %v1525 = vpack.c.bf16 %v1486, %v1473
        %v1526 = vpack.c.bf16 %v1487, %v1474
        %v1527 = vpack.c.bf16 %v1488, %v1488
        %v1528 = vpack.c.bf16 %v1489, %v1489
        %v1529 = vpack.c.bf16 %v1490, %v1490
        %v1530 = vpack.c.bf16 %v1491, %v1491
        %v1531 = vpack.c.bf16 %v1492, %v1492
        %v1532 = vpack.c.bf16 %v1493, %v1493
        %v1533 = vpack.c.bf16 %v1494, %v1494
        %v1534 = vpack.c.bf16 %v1495, %v1495
        %v1535 = vpack.c.bf16 %v1496, %v1496
        %v1536 = vpack.c.bf16 %v1497, %v1497
        %v1537 = vpack.c.bf16 %v1498, %v1498
        %v1538 = vpack.c.bf16 %v1499, %v1499
        %v1539 = vpack.c.bf16 %v1500, %v1500
        %v1579 = vunpack.c.l.b16 %v1501
        %v1580 = vunpack.c.l.b16 %v1502
        %v1581 = vunpack.c.l.b16 %v1503
        %v1582 = vunpack.c.l.b16 %v1504
        %v1583 = vunpack.c.l.b16 %v1505
        %v1584 = vunpack.c.l.b16 %v1506
        %v1585 = vunpack.c.l.b16 %v1507
        %v1586 = vunpack.c.l.b16 %v1508
        %v1587 = vunpack.c.l.b16 %v1509
        %v1588 = vunpack.c.l.b16 %v1510
        %v1589 = vunpack.c.l.b16 %v1511
        %v1590 = vunpack.c.l.b16 %v1512
        %v1591 = vunpack.c.l.b16 %v1513
        %v1592 = vunpack.c.h.b16 %v1501
        %v1593 = vunpack.c.h.b16 %v1502
        %v1594 = vunpack.c.h.b16 %v1503
        %v1595 = vunpack.c.h.b16 %v1504
        %v1596 = vunpack.c.h.b16 %v1505
        %v1597 = vunpack.c.h.b16 %v1506
        %v1598 = vunpack.c.h.b16 %v1507
        %v1599 = vunpack.c.h.b16 %v1508
        %v1600 = vunpack.c.h.b16 %v1509
        %v1601 = vunpack.c.h.b16 %v1510
        %v1602 = vunpack.c.h.b16 %v1511
        %v1603 = vunpack.c.h.b16 %v1512
        %v1604 = vunpack.c.h.b16 %v1513
        %v1605 = vunpack.c.l.b16 %v1514
        %v1606 = vunpack.c.l.b16 %v1515
        %v1607 = vunpack.c.l.b16 %v1516
        %v1608 = vunpack.c.l.b16 %v1517
        %v1609 = vunpack.c.l.b16 %v1518
        %v1610 = vunpack.c.l.b16 %v1519
        %v1611 = vunpack.c.l.b16 %v1520
        %v1612 = vunpack.c.l.b16 %v1521
        %v1613 = vunpack.c.l.b16 %v1522
        %v1614 = vunpack.c.l.b16 %v1523
        %v1615 = vunpack.c.l.b16 %v1524
        %v1616 = vunpack.c.l.b16 %v1525
        %v1617 = vunpack.c.l.b16 %v1526
        %v1618 = vunpack.c.h.b16 %v1514
        %v1619 = vunpack.c.h.b16 %v1515
        %v1620 = vunpack.c.h.b16 %v1516
        %v1621 = vunpack.c.h.b16 %v1517
        %v1622 = vunpack.c.h.b16 %v1518
        %v1623 = vunpack.c.h.b16 %v1519
        %v1624 = vunpack.c.h.b16 %v1520
        %v1625 = vunpack.c.h.b16 %v1521
        %v1626 = vunpack.c.h.b16 %v1522
        %v1627 = vunpack.c.h.b16 %v1523
        %v1628 = vunpack.c.h.b16 %v1524
        %v1629 = vunpack.c.h.b16 %v1525
        %v1630 = vunpack.c.h.b16 %v1526
        %v1631 = vunpack.c.l.b16 %v1527
        %v1632 = vunpack.c.l.b16 %v1528
        %v1633 = vunpack.c.l.b16 %v1529
        %v1634 = vunpack.c.l.b16 %v1530
        %v1635 = vunpack.c.l.b16 %v1531
        %v1636 = vunpack.c.l.b16 %v1532
        %v1637 = vunpack.c.l.b16 %v1533
        %v1638 = vunpack.c.l.b16 %v1534
        %v1639 = vunpack.c.l.b16 %v1535
        %v1640 = vunpack.c.l.b16 %v1536
        %v1641 = vunpack.c.l.b16 %v1537
        %v1642 = vunpack.c.l.b16 %v1538
        %v1643 = vunpack.c.l.b16 %v1539
        %v1644 = vpack.c.b16 %v1580, %v1579
        %v1645 = vpack.c.b16 %v1582, %v1581
        %v1646 = vpack.c.b16 %v1584, %v1583
        %v1647 = vpack.c.b16 %v1586, %v1585
        %v1648 = vpack.c.b16 %v1588, %v1587
        %v1649 = vpack.c.b16 %v1590, %v1589
        %v1650 = vpack.c.b16 %v1591, %v1591
        %v1651 = vpack.c.b16 %v1593, %v1592
        %v1652 = vpack.c.b16 %v1595, %v1594
        %v1653 = vpack.c.b16 %v1597, %v1596
        %v1654 = vpack.c.b16 %v1599, %v1598
        %v1655 = vpack.c.b16 %v1601, %v1600
        %v1656 = vpack.c.b16 %v1603, %v1602
        %v1657 = vpack.c.b16 %v1604, %v1604
        %v1658 = vpack.c.b16 %v1606, %v1605
        %v1659 = vpack.c.b16 %v1608, %v1607
        %v1660 = vpack.c.b16 %v1610, %v1609
        %v1661 = vpack.c.b16 %v1612, %v1611
        %v1662 = vpack.c.b16 %v1614, %v1613
        %v1663 = vpack.c.b16 %v1616, %v1615
        %v1664 = vpack.c.b16 %v1617, %v1617
        %v1665 = vpack.c.b16 %v1619, %v1618
        %v1666 = vpack.c.b16 %v1621, %v1620
        %v1667 = vpack.c.b16 %v1623, %v1622
        %v1668 = vpack.c.b16 %v1625, %v1624
        %v1669 = vpack.c.b16 %v1627, %v1626
        %v1670 = vpack.c.b16 %v1629, %v1628
        %v1671 = vpack.c.b16 %v1630, %v1630
        %v1672 = vpack.c.b16 %v1632, %v1631
        %v1673 = vpack.c.b16 %v1634, %v1633
        %v1674 = vpack.c.b16 %v1636, %v1635
        %v1675 = vpack.c.b16 %v1638, %v1637
        %v1676 = vpack.c.b16 %v1640, %v1639
        %v1677 = vpack.c.b16 %v1642, %v1641
        %v1678 = vpack.c.b16 %v1643, %v1643
        %1714 = vst [vmem:[%s188] sm:$0xff] %v1644
        %1715 = vst [vmem:[%s188 + $0x8] sm:$0xff] %v1645
        %1716 = vst [vmem:[%s188 + $0x10] sm:$0xff] %v1646
        %1717 = vst [vmem:[%s188 + $0x18] sm:$0xff] %v1647
        %1718 = vst [vmem:[%s188 + $0x20] sm:$0xff] %v1648
        %1719 = vst [vmem:[%s188 + $0x28] sm:$0xff] %v1649
        %vm1720 = vcmask 732160
        %1721 = vst.msk [vmem:[%s188 + $0x30] sm:$0xf] %vm1720, %v1650
        %1722 = vst [vmem:[%s188 + $0x34] sm:$0xff] %v1651
        %1723 = vst [vmem:[%s188 + $0x3c] sm:$0xff] %v1652
        %1724 = vst [vmem:[%s188 + $0x44] sm:$0xff] %v1653
        %1725 = vst [vmem:[%s188 + $0x4c] sm:$0xff] %v1654
        %1726 = vst [vmem:[%s188 + $0x54] sm:$0xff] %v1655
        %1727 = vst [vmem:[%s188 + $0x5c] sm:$0xff] %v1656
        %1728 = vst.msk [vmem:[%s188 + $0x64] sm:$0xf] %vm1720, %v1657
        %1729 = vst [vmem:[%s188 + $0x68] sm:$0xff] %v1658
        %1730 = vst [vmem:[%s188 + $0x70] sm:$0xff] %v1659
        %1731 = vst [vmem:[%s188 + $0x78] sm:$0xff] %v1660
        %1732 = vst [vmem:[%s188 + $0x80] sm:$0xff] %v1661
        %1733 = vst [vmem:[%s188 + $0x88] sm:$0xff] %v1662
        %1734 = vst [vmem:[%s188 + $0x90] sm:$0xff] %v1663
        %1735 = vst.msk [vmem:[%s188 + $0x98] sm:$0xf] %vm1720, %v1664
        %1736 = vst [vmem:[%s188 + $0x9c] sm:$0xff] %v1665
        %1737 = vst [vmem:[%s188 + $0xa4] sm:$0xff] %v1666
        %1738 = vst [vmem:[%s188 + $0xac] sm:$0xff] %v1667
        %1739 = vst [vmem:[%s188 + $0xb4] sm:$0xff] %v1668
        %1740 = vst [vmem:[%s188 + $0xbc] sm:$0xff] %v1669
        %1741 = vst [vmem:[%s188 + $0xc4] sm:$0xff] %v1670
        %1742 = vst.msk [vmem:[%s188 + $0xcc] sm:$0xf] %vm1720, %v1671
        %1743 = vst [vmem:[%s188 + $0xd0] sm:$0xff] %v1672
        %1744 = vst [vmem:[%s188 + $0xd8] sm:$0xff] %v1673
        %1745 = vst [vmem:[%s188 + $0xe0] sm:$0xff] %v1674
        %1746 = vst [vmem:[%s188 + $0xe8] sm:$0xff] %v1675
        %1747 = vst [vmem:[%s188 + $0xf0] sm:$0xff] %v1676
        %1748 = vst [vmem:[%s188 + $0xf8] sm:$0xff] %v1677
        %1749 = vst.msk [vmem:[%s188 + $0x100] sm:$0xf] %vm1720, %v1678
        %s1750 = sand.u32 %s109, 1
        %s1751 = scalar_lea.sflag [#allocation3], %s1750
        %s1752 = sand.u32 %s109, 1
        %s1753 = smul.addr %s1752, 260
        %s1754 = scalar_lea.vmem [#allocation2], %s1753
        // Predicated region
        $region33: #{tpu_custom_call.1} parent=31 // pred_check
          %p1755 = pneg %p119
        $region34: #{tpu_custom_call.1} parent=31 // pred_check_branch
          %1757 = sbr.rel (%p1755) target = $region36
        $region35: #{tpu_custom_call.1} parent=31 // pred_region
          %s1758 = smul.u32 13, %s22
          %s1760 = ssub.s32 4160, 4160
          %1761 = vsyncadd %s1751, %s1760
          %s1762 = smul.addr %s21, 65
          %s1763 = sadd.s32 %s1758, %s1762
          %s1764 = smul.addr %s1763, 64
          %s1765 = scalar_lea.hbm %s3, %s1764
          %s1766 = sshll.u32 %s1754, 4
          %s1767 = int_to_ptr.vmem [resolvable:$true] %s1766
          %1772 = dma.vmem_to_hbm [thread:$0]  %s1767, 4160, %s1765, %s1751, 832, 832, 52
        $region36: #{tpu_custom_call.1} parent=31 // pred_fallthru
          _
      $region32: #{tpu_custom_call.1} parent=5 // pred_fallthru
        _
      %p1773 = scmp.le.s32.totalorder 2, %s12
      // Predicated region
      $region37: #{tpu_custom_call.1} parent=5 // pred_check
        %p1774 = pneg %p1773
      $region38: #{tpu_custom_call.1} parent=5 // pred_check_branch
        %1776 = sbr.rel (%p1774) target = $region40
      $region39: #{tpu_custom_call.1} parent=5 // pred_region
        %s1777 = ssub.s32 %s12, 2
        // Predicated region
        $region41: #{tpu_custom_call.1} parent=39 // pred_check
          %p1778 = pneg %p125
        $region42: #{tpu_custom_call.1} parent=39 // pred_check_branch
          %1780 = sbr.rel (%p1778) target = $region44
        $region43: #{tpu_custom_call.1} parent=39 // pred_region
          %s1781 = sand.u32 %s110, 1
          %s1782 = scalar_lea.sflag [#allocation3], %s1781
          %s1783 = sand.u32 %s110, 1
          %s1784 = smul.addr %s1783, 260
          %s1785 = scalar_lea.vmem [#allocation2], %s1784
          %1786 = dma.done %s1782, 4160
        $region44: #{tpu_custom_call.1} parent=39 // pred_fallthru
          _
      $region40: #{tpu_custom_call.1} parent=5 // pred_fallthru
        _
    $region6: #{tpu_custom_call.1} parent=1 // loop_footer
      %s16 = sadd.s32 1, %s12
    $region7: #{tpu_custom_call.1} parent=1 // loop_footer_branch
      %11 = sbr.rel target = $region3
    $region8: #{tpu_custom_call.1} parent=1 // loop_exit
      _
    %1787 = vsyncpa [#allocation3], 1
    %s1788 = scalar_lea.sflag [#allocation3], 1
    %1789 = vsyncpa %s1788, 1

</llo_original>
